<compile_context>
chip_gen: v5e
topology: v5e:2x2
jax: 0.10.0
libtpu: 0.0.40
codegen_flags: <defaults>
</compile_context>

<pallas_src>
import jax
import jax.numpy as jnp
from jax.experimental import pallas as pl
from jax.experimental.pallas import tpu as pltpu

LABEL_DIM = 10
IMG_SHAPE = (1, 28, 28)
IMG_DIM = IMG_SHAPE[0] * IMG_SHAPE[1] * IMG_SHAPE[2]      # 784
IN_DIM = LABEL_DIM + IMG_DIM                               # 794 (torch layout)
H1, H2, OUT = 512, 256, 1

LAB_PAD = 128      # one-hot width (lane-aligned); emb_proj rows 10..127 are zero
OUT_PAD = 128      # lane-dense output; column 0 holds the real validity score
TM_MAX = 512       # batch tile cap for large batches


def _round_up(x, m):
    return (x + m - 1) // m * m


def _leaky_relu(x, slope=0.2):
    return jnp.where(x > 0, x, slope * x)


def disc_kernel(x_ref, lab_ref, w1_ref, embp_ref, b1_ref, w2_ref, b2_ref,
                w3_ref, b3_ref, o_ref):
    tm = x_ref.shape[0]

    # ---- Layer 1, image part: f32 tile -> bf16 in-kernel, K = 784 contraction
    # (masked K-tail on the MXU; both operands are exactly K=784, no junk).
    x_bf = x_ref[...].astype(jnp.bfloat16)                          # (tm, 784)
    h = jnp.dot(x_bf, w1_ref[...], preferred_element_type=jnp.float32)

    # ---- Layer 1, label part: int32 labels -> one-hot bf16 on the VPU, one
    # tiny MXU pass against the resident folded embedding projection.
    lab = lab_ref[...]                                              # (tm, 1) i32
    iota = jax.lax.broadcasted_iota(jnp.int32, (tm, LAB_PAD), 1)
    onehot = jnp.where(iota == lab, 1.0, 0.0).astype(jnp.bfloat16)  # (tm, 128)
    h = h + jnp.dot(onehot, embp_ref[...], preferred_element_type=jnp.float32)

    h = _leaky_relu(h + b1_ref[...])                                # (tm, 512) f32

    # ---- Layer 2.
    h = jnp.dot(h.astype(jnp.bfloat16), w2_ref[...],
                preferred_element_type=jnp.float32)
    h = _leaky_relu(h + b2_ref[...])                                # (tm, 256) f32

    # ---- Layer 3 (N padded to 128 -> unmasked lane-dense store, bf16 out).
    h = jnp.dot(h.astype(jnp.bfloat16), w3_ref[...],
                preferred_element_type=jnp.float32)
    o_ref[...] = jax.nn.sigmoid(h + b3_ref[...]).astype(o_ref.dtype)  # (tm, 128)


def init_params(key):
    """Torch-layout f32 parameters (emb: (10,10), W: (in,out), b: (1,out))."""
    ks = jax.random.split(key, 7)
    scale = 0.02
    return {
        "emb": jax.random.normal(ks[0], (LABEL_DIM, LABEL_DIM), jnp.float32) * scale,
        "w1": jax.random.normal(ks[1], (IN_DIM, H1), jnp.float32) * scale,
        "b1": jax.random.normal(ks[2], (1, H1), jnp.float32) * scale,
        "w2": jax.random.normal(ks[3], (H1, H2), jnp.float32) * scale,
        "b2": jax.random.normal(ks[4], (1, H2), jnp.float32) * scale,
        "w3": jax.random.normal(ks[5], (H2, OUT), jnp.float32) * scale,
        "b3": jax.random.normal(ks[6], (1, OUT), jnp.float32) * scale,
    }


def prepare_params(params):
    """One-time fold / pad / cast of parameters for the kernel (not per call)."""
    w1 = params["w1"]                                    # (794, 512) f32
    # Fold label-embedding through layer 1: emb_proj = emb @ W1[784:794, :].
    emb_proj = params["emb"] @ w1[IMG_DIM:]              # (10, 512) f32
    emb_proj = jnp.pad(emb_proj, ((0, LAB_PAD - LABEL_DIM), (0, 0)))   # (128,512)
    # Last layer padded to a lane-dense N=128 (extra columns are zero).
    w3_pad = jnp.pad(params["w3"], ((0, 0), (0, OUT_PAD - OUT)))
    b3_pad = jnp.pad(params["b3"], ((0, 0), (0, OUT_PAD - OUT)))
    return {
        "w1": w1[:IMG_DIM].astype(jnp.bfloat16),         # (784, 512) bf16
        "emb_proj": emb_proj.astype(jnp.bfloat16),       # (128, 512) bf16
        "b1": params["b1"],                              # (1, 512)   f32
        "w2": params["w2"].astype(jnp.bfloat16),         # (512, 256) bf16
        "b2": params["b2"],                              # (1, 256)   f32
        "w3": w3_pad.astype(jnp.bfloat16),               # (256, 128) bf16
        "b3": b3_pad,                                    # (1, 128)   f32
    }


def discriminator_forward(img, labels, prepared):
    """img: (B, 1, 28, 28) f32, labels: (B,) int -> validity (B, 1) f32."""
    B = img.shape[0]
    x = img.reshape(B, -1)                               # (B, 784) f32, no copy
    lab = labels.astype(jnp.int32).reshape(B, 1)         # (B, 1) i32

    # Batch tile: small batches -> one padded tile (weight-DMA bound anyway);
    # bigger batches -> >= 2 grid steps so v7x's two TensorCores both get work.
    if B <= 128:
        tm = _round_up(max(B, 1), 8)
    else:
        tm = min(TM_MAX, _round_up(-(-B // 2), 8))
    b_pad = _round_up(B, tm)
    if b_pad != B:
        x = jnp.pad(x, ((0, b_pad - B), (0, 0)))
        lab = jnp.pad(lab, ((0, b_pad - B), (0, 0)))
    grid = (b_pad // tm,)

    in_specs = [
        pl.BlockSpec((tm, IMG_DIM), lambda i: (i, 0)),    # f32 image tile
        pl.BlockSpec((tm, 1), lambda i: (i, 0)),          # int32 label tile
        pl.BlockSpec((IMG_DIM, H1), lambda i: (0, 0)),    # W1       (resident)
        pl.BlockSpec((LAB_PAD, H1), lambda i: (0, 0)),    # emb_proj (resident)
        pl.BlockSpec((1, H1), lambda i: (0, 0)),          # b1       (resident)
        pl.BlockSpec((H1, H2), lambda i: (0, 0)),         # W2       (resident)
        pl.BlockSpec((1, H2), lambda i: (0, 0)),          # b2       (resident)
        pl.BlockSpec((H2, OUT_PAD), lambda i: (0, 0)),    # W3       (resident)
        pl.BlockSpec((1, OUT_PAD), lambda i: (0, 0)),     # b3       (resident)
    ]
    out_spec = pl.BlockSpec((tm, OUT_PAD), lambda i: (i, 0))

    out_pad = pl.pallas_call(
        disc_kernel,
        out_shape=jax.ShapeDtypeStruct((b_pad, OUT_PAD), jnp.bfloat16),
        grid=grid,
        in_specs=in_specs,
        out_specs=out_spec,
        compiler_params=pltpu.CompilerParams(
            dimension_semantics=("parallel",),
            vmem_limit_bytes=64 * 1024 * 1024,
        ),
    )(x, lab, prepared["w1"], prepared["emb_proj"], prepared["b1"],
      prepared["w2"], prepared["b2"], prepared["w3"], prepared["b3"])

    return out_pad[:B, :OUT].astype(jnp.float32)


def reference_forward_f32(img, labels, params):
    """Pure-JAX f32 reference matching the PyTorch module exactly."""
    B = img.shape[0]
    x = jnp.concatenate(
        [img.reshape(B, -1), jnp.take(params["emb"], labels, axis=0)], axis=1)
    h = _leaky_relu(x @ params["w1"] + params["b1"])
    h = _leaky_relu(h @ params["w2"] + params["b2"])
    return jax.nn.sigmoid(h @ params["w3"] + params["b3"])


def reference_forward_mixed(img, labels, prepared):
    """Pure-JAX reference using the same bf16/f32 mixed precision as the kernel."""
    B = img.shape[0]
    x_bf = img.reshape(B, -1).astype(jnp.bfloat16)
    h = jnp.dot(x_bf, prepared["w1"], preferred_element_type=jnp.float32)
    # One-hot @ emb_proj with exact 0/1 weights == row gather of bf16 emb_proj.
    h = h + jnp.take(prepared["emb_proj"], labels, axis=0).astype(jnp.float32)
    h = _leaky_relu(h + prepared["b1"])
    h = jnp.dot(h.astype(jnp.bfloat16), prepared["w2"],
                preferred_element_type=jnp.float32)
    h = _leaky_relu(h + prepared["b2"])
    h = jnp.dot(h.astype(jnp.bfloat16), prepared["w3"],
                preferred_element_type=jnp.float32)
    out = jax.nn.sigmoid(h + prepared["b3"]).astype(jnp.bfloat16)
    return out[:, :OUT].astype(jnp.float32)


if __name__ == "__main__":
    key = jax.random.PRNGKey(0)
    k_img, k_lab, k_par = jax.random.split(key, 3)

    B = 2
    img = jax.random.normal(k_img, (B,) + IMG_SHAPE, jnp.float32)   # (2, 1, 28, 28)
    labels = jax.random.randint(k_lab, (B,), 0, LABEL_DIM, jnp.int32)
    params = init_params(k_par)
    prepared = prepare_params(params)

    validity = discriminator_forward(img, labels, prepared)
    validity = jax.block_until_ready(validity)
    assert validity.shape == (B, OUT)
    assert bool(jnp.all(jnp.isfinite(validity)))

    # Precision-matched check (same bf16/f32 mix and bf16 output as the kernel).
    ref_mixed = reference_forward_mixed(img, labels, prepared)
    assert jnp.allclose(validity, ref_mixed, atol=5e-3, rtol=0.0), (
        validity, ref_mixed)

    # Sanity check against the full-f32 PyTorch-equivalent reference.
    ref_f32 = reference_forward_f32(img, labels, params)
    assert jnp.allclose(validity, ref_f32, atol=2e-2, rtol=0.0), (
        validity, ref_f32)

    print("KERNEL_OK")
</pallas_src>

<mosaic_0001>
module attributes {stable_mosaic.version = 11 : i64} {
  func.func @disc_kernel(%arg0: i32, %arg1: memref<8x784xf32, #tpu.memory_space<vmem>>, %arg2: memref<8x1xi32, #tpu.memory_space<vmem>>, %arg3: memref<784x512xbf16, #tpu.memory_space<vmem>>, %arg4: memref<128x512xbf16, #tpu.memory_space<vmem>>, %arg5: memref<1x512xf32, #tpu.memory_space<vmem>>, %arg6: memref<512x256xbf16, #tpu.memory_space<vmem>>, %arg7: memref<1x256xf32, #tpu.memory_space<vmem>>, %arg8: memref<256x128xbf16, #tpu.memory_space<vmem>>, %arg9: memref<1x128xf32, #tpu.memory_space<vmem>>, %arg10: memref<8x128xbf16, #tpu.memory_space<vmem>>) attributes {dimension_semantics = [#tpu.dimension_semantics<parallel>], iteration_bounds = array<i64: 1>, scalar_prefetch = 0 : i64, scratch_operands = 0 : i64, tpu.core_type = #tpu.core_type<tc>, window_params = [{transform_indices = @transform_0, window_bounds = array<i64: 8, 784>}, {transform_indices = @transform_1, window_bounds = array<i64: 8, 1>}, {pipeline_mode = #tpu.pipeline_mode<synchronous>, transform_indices = @transform_2, window_bounds = array<i64: 784, 512>}, {pipeline_mode = #tpu.pipeline_mode<synchronous>, transform_indices = @transform_3, window_bounds = array<i64: 128, 512>}, {pipeline_mode = #tpu.pipeline_mode<synchronous>, transform_indices = @transform_4, window_bounds = array<i64: 1, 512>}, {pipeline_mode = #tpu.pipeline_mode<synchronous>, transform_indices = @transform_5, window_bounds = array<i64: 512, 256>}, {pipeline_mode = #tpu.pipeline_mode<synchronous>, transform_indices = @transform_6, window_bounds = array<i64: 1, 256>}, {pipeline_mode = #tpu.pipeline_mode<synchronous>, transform_indices = @transform_7, window_bounds = array<i64: 256, 128>}, {pipeline_mode = #tpu.pipeline_mode<synchronous>, transform_indices = @transform_8, window_bounds = array<i64: 1, 128>}, {transform_indices = @transform_9, window_bounds = array<i64: 8, 128>}]} {
    %c0 = arith.constant 0 : index
    %c0_0 = arith.constant 0 : index
    %0 = vector.load %arg1[%c0, %c0_0] : memref<8x784xf32, #tpu.memory_space<vmem>>, vector<8x784xf32>
    %1 = arith.truncf %0 : vector<8x784xf32> to vector<8x784xbf16>
    %c0_1 = arith.constant 0 : index
    %c0_2 = arith.constant 0 : index
    %2 = vector.load %arg3[%c0_1, %c0_2] : memref<784x512xbf16, #tpu.memory_space<vmem>>, vector<784x512xbf16>
    %cst = arith.constant dense<0.000000e+00> : vector<8x512xf32>
    %3 = tpu.matmul %1, %2, %cst {dimension_numbers = #tpu.dot_dimension_numbers<[1], [0], [0], [1], [0, 0, 1, 1], [], []>} : vector<8x784xbf16>, vector<784x512xbf16>, vector<8x512xf32> -> vector<8x512xf32>
    %c0_3 = arith.constant 0 : index
    %c0_4 = arith.constant 0 : index
    %4 = vector.load %arg2[%c0_3, %c0_4] : memref<8x1xi32, #tpu.memory_space<vmem>>, vector<8x1xi32>
    %5 = tpu.iota {dimensions = array<i32: 1>} : vector<8x128xi32>
    %6 = vector.broadcast %4 : vector<8x1xi32> to vector<8x128xi32>
    %7 = arith.cmpi eq, %5, %6 : vector<8x128xi32>
    %cst_5 = arith.constant 1.000000e+00 : f32
    %cst_6 = arith.constant 0.000000e+00 : f32
    %8 = vector.broadcast %cst_5 : f32 to vector<8x128xf32>
    %9 = vector.broadcast %cst_6 : f32 to vector<8x128xf32>
    %10 = arith.select %7, %8, %9 : vector<8x128xi1>, vector<8x128xf32>
    %11 = arith.truncf %10 : vector<8x128xf32> to vector<8x128xbf16>
    %c0_7 = arith.constant 0 : index
    %c0_8 = arith.constant 0 : index
    %12 = vector.load %arg4[%c0_7, %c0_8] : memref<128x512xbf16, #tpu.memory_space<vmem>>, vector<128x512xbf16>
    %cst_9 = arith.constant dense<0.000000e+00> : vector<8x512xf32>
    %13 = tpu.matmul %11, %12, %cst_9 {dimension_numbers = #tpu.dot_dimension_numbers<[1], [0], [0], [1], [0, 0, 1, 1], [], []>} : vector<8x128xbf16>, vector<128x512xbf16>, vector<8x512xf32> -> vector<8x512xf32>
    %14 = arith.addf %3, %13 : vector<8x512xf32>
    %c0_10 = arith.constant 0 : index
    %c0_11 = arith.constant 0 : index
    %15 = vector.load %arg5[%c0_10, %c0_11] : memref<1x512xf32, #tpu.memory_space<vmem>>, vector<1x512xf32>
    %16 = vector.broadcast %15 : vector<1x512xf32> to vector<8x512xf32>
    %17 = arith.addf %14, %16 : vector<8x512xf32>
    %cst_12 = arith.constant 0.000000e+00 : f32
    %18 = vector.broadcast %cst_12 : f32 to vector<8x512xf32>
    %19 = arith.cmpf ogt, %17, %18 : vector<8x512xf32>
    %cst_13 = arith.constant 2.000000e-01 : f32
    %20 = vector.broadcast %cst_13 : f32 to vector<8x512xf32>
    %21 = arith.mulf %20, %17 : vector<8x512xf32>
    %22 = arith.select %19, %17, %21 : vector<8x512xi1>, vector<8x512xf32>
    %23 = arith.truncf %22 : vector<8x512xf32> to vector<8x512xbf16>
    %c0_14 = arith.constant 0 : index
    %c0_15 = arith.constant 0 : index
    %24 = vector.load %arg6[%c0_14, %c0_15] : memref<512x256xbf16, #tpu.memory_space<vmem>>, vector<512x256xbf16>
    %cst_16 = arith.constant dense<0.000000e+00> : vector<8x256xf32>
    %25 = tpu.matmul %23, %24, %cst_16 {dimension_numbers = #tpu.dot_dimension_numbers<[1], [0], [0], [1], [0, 0, 1, 1], [], []>} : vector<8x512xbf16>, vector<512x256xbf16>, vector<8x256xf32> -> vector<8x256xf32>
    %c0_17 = arith.constant 0 : index
    %c0_18 = arith.constant 0 : index
    %26 = vector.load %arg7[%c0_17, %c0_18] : memref<1x256xf32, #tpu.memory_space<vmem>>, vector<1x256xf32>
    %27 = vector.broadcast %26 : vector<1x256xf32> to vector<8x256xf32>
    %28 = arith.addf %25, %27 : vector<8x256xf32>
    %cst_19 = arith.constant 0.000000e+00 : f32
    %29 = vector.broadcast %cst_19 : f32 to vector<8x256xf32>
    %30 = arith.cmpf ogt, %28, %29 : vector<8x256xf32>
    %cst_20 = arith.constant 2.000000e-01 : f32
    %31 = vector.broadcast %cst_20 : f32 to vector<8x256xf32>
    %32 = arith.mulf %31, %28 : vector<8x256xf32>
    %33 = arith.select %30, %28, %32 : vector<8x256xi1>, vector<8x256xf32>
    %34 = arith.truncf %33 : vector<8x256xf32> to vector<8x256xbf16>
    %c0_21 = arith.constant 0 : index
    %c0_22 = arith.constant 0 : index
    %35 = vector.load %arg8[%c0_21, %c0_22] : memref<256x128xbf16, #tpu.memory_space<vmem>>, vector<256x128xbf16>
    %cst_23 = arith.constant dense<0.000000e+00> : vector<8x128xf32>
    %36 = tpu.matmul %34, %35, %cst_23 {dimension_numbers = #tpu.dot_dimension_numbers<[1], [0], [0], [1], [0, 0, 1, 1], [], []>} : vector<8x256xbf16>, vector<256x128xbf16>, vector<8x128xf32> -> vector<8x128xf32>
    %c0_24 = arith.constant 0 : index
    %c0_25 = arith.constant 0 : index
    %37 = vector.load %arg9[%c0_24, %c0_25] : memref<1x128xf32, #tpu.memory_space<vmem>>, vector<1x128xf32>
    %38 = vector.broadcast %37 : vector<1x128xf32> to vector<8x128xf32>
    %39 = arith.addf %36, %38 : vector<8x128xf32>
    %40 = arith.negf %39 : vector<8x128xf32>
    %41 = math.exp %40 : vector<8x128xf32>
    %cst_26 = arith.constant 1.000000e+00 : f32
    %42 = vector.broadcast %cst_26 : f32 to vector<8x128xf32>
    %43 = arith.addf %42, %41 : vector<8x128xf32>
    %44 = arith.divf %42, %43 : vector<8x128xf32>
    %45 = arith.truncf %44 : vector<8x128xf32> to vector<8x128xbf16>
    %c0_27 = arith.constant 0 : index
    %c0_28 = arith.constant 0 : index
    %46 = vector.load %arg10[%c0_27, %c0_28] : memref<8x128xbf16, #tpu.memory_space<vmem>>, vector<8x128xbf16>
    tpu.vector_store %arg10[%c0_27, %c0_28], %45 {strides = array<i32>} : memref<8x128xbf16, #tpu.memory_space<vmem>>, vector<8x128xbf16>,
    return
  }
  func.func @transform_0(%arg0: i32) -> (i32, i32) {
    %c0_i32 = arith.constant 0 : i32
    %c0_i32_0 = arith.constant 0 : i32
    return %arg0, %c0_i32 : i32, i32
  }
  func.func @transform_1(%arg0: i32) -> (i32, i32) {
    %c0_i32 = arith.constant 0 : i32
    %c0_i32_0 = arith.constant 0 : i32
    return %arg0, %c0_i32 : i32, i32
  }
  func.func @transform_2(%arg0: i32) -> (i32, i32) {
    %c0_i32 = arith.constant 0 : i32
    %c0_i32_0 = arith.constant 0 : i32
    %c0_i32_1 = arith.constant 0 : i32
    return %c0_i32, %c0_i32_0 : i32, i32
  }
  func.func @transform_3(%arg0: i32) -> (i32, i32) {
    %c0_i32 = arith.constant 0 : i32
    %c0_i32_0 = arith.constant 0 : i32
    %c0_i32_1 = arith.constant 0 : i32
    return %c0_i32, %c0_i32_0 : i32, i32
  }
  func.func @transform_4(%arg0: i32) -> (i32, i32) {
    %c0_i32 = arith.constant 0 : i32
    %c0_i32_0 = arith.constant 0 : i32
    %c0_i32_1 = arith.constant 0 : i32
    return %c0_i32, %c0_i32_0 : i32, i32
  }
  func.func @transform_5(%arg0: i32) -> (i32, i32) {
    %c0_i32 = arith.constant 0 : i32
    %c0_i32_0 = arith.constant 0 : i32
    %c0_i32_1 = arith.constant 0 : i32
    return %c0_i32, %c0_i32_0 : i32, i32
  }
  func.func @transform_6(%arg0: i32) -> (i32, i32) {
    %c0_i32 = arith.constant 0 : i32
    %c0_i32_0 = arith.constant 0 : i32
    %c0_i32_1 = arith.constant 0 : i32
    return %c0_i32, %c0_i32_0 : i32, i32
  }
  func.func @transform_7(%arg0: i32) -> (i32, i32) {
    %c0_i32 = arith.constant 0 : i32
    %c0_i32_0 = arith.constant 0 : i32
    %c0_i32_1 = arith.constant 0 : i32
    return %c0_i32, %c0_i32_0 : i32, i32
  }
  func.func @transform_8(%arg0: i32) -> (i32, i32) {
    %c0_i32 = arith.constant 0 : i32
    %c0_i32_0 = arith.constant 0 : i32
    %c0_i32_1 = arith.constant 0 : i32
    return %c0_i32, %c0_i32_0 : i32, i32
  }
  func.func @transform_9(%arg0: i32) -> (i32, i32) {
    %c0_i32 = arith.constant 0 : i32
    %c0_i32_0 = arith.constant 0 : i32
    return %arg0, %c0_i32 : i32, i32
  }
}

</mosaic_0001>

<llo_original>
// kernel: tpu_custom_call.1
$region0: #{tpu_custom_call.1}
  #allocation0 [shape = 'u32[]', space=smem, size = 0x4, offset = 0x4, fixed_abs, tag = 'smem constant byte address 0x4 - core index']
  #allocation1 [shape = 'u32[72,128]{1,0:T(1,128)}', space=vmem, size = 0x9000, scoped, tag = 'internal scratch']
  %s0 = inlined_call_operand.hbm [shape: f32[8,784], index: 0, kind: input, shape index: {}]
  %s1 = inlined_call_operand.vmem [shape: s32[8,1], index: 1, kind: input, shape index: {}]
  %s2 = inlined_call_operand.hbm [shape: bf16[784,512], index: 2, kind: input, shape index: {}]
  %s3 = inlined_call_operand.hbm [shape: bf16[128,512], index: 3, kind: input, shape index: {}]
  %s4 = inlined_call_operand.vmem [shape: f32[1,512], index: 4, kind: input, shape index: {}]
  %s5 = inlined_call_operand.hbm [shape: bf16[512,256], index: 5, kind: input, shape index: {}]
  %s6 = inlined_call_operand.vmem [shape: f32[1,256], index: 6, kind: input, shape index: {}]
  %s7 = inlined_call_operand.hbm [shape: bf16[256,128], index: 7, kind: input, shape index: {}]
  %s8 = inlined_call_operand.vmem [shape: f32[1,128], index: 8, kind: input, shape index: {}]
  %s9 = inlined_call_operand.hbm [shape: bf16[8,128], index: 9, kind: output, shape index: {}]
  %s10 = sld [smem:[#allocation0]]
  $region66: #{tpu_custom_call.1} parent=0
    _
  %s12 = ssub.s32 1, %s10
  %s13 = scalar_select 0, %s12, %s10
  $region1: #{tpu_custom_call.1} parent=0
    #allocation2 [shape = 'u8[28672]{0}', space=vmem, size = 0x7000, scoped, tag = 'input window, operand 0, single buffered']
    #allocation3 [shape = 's32[1]{0}', space=sflag, size = 0x4, scoped, tag = 'scoped memory for tpu_custom_call.1']
    #allocation4 [shape = 's32[1]{0}', space=sflag, size = 0x4, scoped, tag = 'scoped memory for tpu_custom_call.1']
    #allocation5 [shape = 'u8[802816]{0}', space=vmem, size = 0xc4000, scoped, tag = 'input window, operand 2, single buffered']
    #allocation6 [shape = 's32[1]{0}', space=sflag, size = 0x4, scoped, tag = 'scoped memory for tpu_custom_call.1']
    #allocation7 [shape = 'u8[131072]{0}', space=vmem, size = 0x20000, scoped, tag = 'input window, operand 3, single buffered']
    #allocation8 [shape = 'u8[262144]{0}', space=vmem, size = 0x40000, scoped, tag = 'input window, operand 5, single buffered']
    #allocation9 [shape = 's32[1]{0}', space=sflag, size = 0x4, scoped, tag = 'scoped memory for tpu_custom_call.1']
    #allocation10 [shape = 'u8[65536]{0}', space=vmem, size = 0x10000, scoped, tag = 'input window, operand 7, single buffered']
    #allocation11 [shape = 'u8[2048]{0}', space=vmem, size = 0x800, scoped, tag = 'output window, operand 0, single buffered']
    %14 = vsyncpa [#allocation3], 0
    %15 = vsyncpa [#allocation6], 0
    %16 = vsyncpa [#allocation9], 0
    %17 = vsyncpa [#allocation4], 0
    // Predicated region
    $region2: #{tpu_custom_call.1} parent=1 // pred_check
      _
    $region3: #{tpu_custom_call.1} parent=1 // pred_check_branch
      %19 = sbr.rel (0) target = $region5
    $region4: #{tpu_custom_call.1} parent=1 // pred_region
      %21 = vsyncadd [#allocation3], 0
      %s23 = sshll.u32 %s0, 4
      %s24 = int_to_ptr.hbm [resolvable:$true] %s23
      %s25 = sshll.u32 [#allocation2], 4
      %s26 = int_to_ptr.vmem [resolvable:$true] %s25
      %28 = dma.hbm_to_vmem [thread:$0]  %s24, 896, %s26, [#allocation3]
    $region5: #{tpu_custom_call.1} parent=1 // pred_fallthru
      _
    // Predicated region
    $region6: #{tpu_custom_call.1} parent=1 // pred_check
      _
    $region7: #{tpu_custom_call.1} parent=1 // pred_check_branch
      %30 = sbr.rel (0) target = $region9
    $region8: #{tpu_custom_call.1} parent=1 // pred_region
      _
    $region9: #{tpu_custom_call.1} parent=1 // pred_fallthru
      _
    // Predicated region
    $region10: #{tpu_custom_call.1} parent=1 // pred_check
      _
    $region11: #{tpu_custom_call.1} parent=1 // pred_check_branch
      %32 = sbr.rel (0) target = $region13
    $region12: #{tpu_custom_call.1} parent=1 // pred_region
      %34 = vsyncadd [#allocation6], 0
      %s35 = sshll.u32 %s2, 4
      %s36 = int_to_ptr.hbm [resolvable:$true] %s35
      %s37 = sshll.u32 [#allocation5], 4
      %s38 = int_to_ptr.vmem [resolvable:$true] %s37
      %43 = dma.hbm_to_vmem [thread:$0]  %s36, 25088, %s38, [#allocation6], 256, 256, 16
    $region13: #{tpu_custom_call.1} parent=1 // pred_fallthru
      _
    // Predicated region
    $region14: #{tpu_custom_call.1} parent=1 // pred_check
      _
    $region15: #{tpu_custom_call.1} parent=1 // pred_check_branch
      %45 = sbr.rel (0) target = $region17
    $region16: #{tpu_custom_call.1} parent=1 // pred_region
      %47 = vsyncadd [#allocation6], 0
      %s48 = sshll.u32 %s3, 4
      %s49 = int_to_ptr.hbm [resolvable:$true] %s48
      %s50 = sshll.u32 [#allocation7], 4
      %s51 = int_to_ptr.vmem [resolvable:$true] %s50
      %56 = dma.hbm_to_vmem [thread:$0]  %s49, 4096, %s51, [#allocation6], 256, 256, 16
    $region17: #{tpu_custom_call.1} parent=1 // pred_fallthru
      _
    // Predicated region
    $region18: #{tpu_custom_call.1} parent=1 // pred_check
      _
    $region19: #{tpu_custom_call.1} parent=1 // pred_check_branch
      %58 = sbr.rel (0) target = $region21
    $region20: #{tpu_custom_call.1} parent=1 // pred_region
      _
    $region21: #{tpu_custom_call.1} parent=1 // pred_fallthru
      _
    // Predicated region
    $region22: #{tpu_custom_call.1} parent=1 // pred_check
      _
    $region23: #{tpu_custom_call.1} parent=1 // pred_check_branch
      %60 = sbr.rel (0) target = $region25
    $region24: #{tpu_custom_call.1} parent=1 // pred_region
      %62 = vsyncadd [#allocation9], 0
      %s63 = sshll.u32 %s5, 4
      %s64 = int_to_ptr.hbm [resolvable:$true] %s63
      %s65 = sshll.u32 [#allocation8], 4
      %s66 = int_to_ptr.vmem [resolvable:$true] %s65
      %71 = dma.hbm_to_vmem [thread:$0]  %s64, 8192, %s66, [#allocation9], 128, 128, 8
    $region25: #{tpu_custom_call.1} parent=1 // pred_fallthru
      _
    // Predicated region
    $region26: #{tpu_custom_call.1} parent=1 // pred_check
      _
    $region27: #{tpu_custom_call.1} parent=1 // pred_check_branch
      %73 = sbr.rel (0) target = $region29
    $region28: #{tpu_custom_call.1} parent=1 // pred_region
      _
    $region29: #{tpu_custom_call.1} parent=1 // pred_fallthru
      _
    // Predicated region
    $region30: #{tpu_custom_call.1} parent=1 // pred_check
      _
    $region31: #{tpu_custom_call.1} parent=1 // pred_check_branch
      %75 = sbr.rel (0) target = $region33
    $region32: #{tpu_custom_call.1} parent=1 // pred_region
      %77 = vsyncadd [#allocation9], 0
      %s78 = sshll.u32 %s7, 4
      %s79 = int_to_ptr.hbm [resolvable:$true] %s78
      %s80 = sshll.u32 [#allocation10], 4
      %s81 = int_to_ptr.vmem [resolvable:$true] %s80
      %86 = dma.hbm_to_vmem [thread:$0]  %s79, 2048, %s81, [#allocation9], 64, 64, 4
    $region33: #{tpu_custom_call.1} parent=1 // pred_fallthru
      _
    // Predicated region
    $region34: #{tpu_custom_call.1} parent=1 // pred_check
      _
    $region35: #{tpu_custom_call.1} parent=1 // pred_check_branch
      %88 = sbr.rel (0) target = $region37
    $region36: #{tpu_custom_call.1} parent=1 // pred_region
      _
    $region37: #{tpu_custom_call.1} parent=1 // pred_fallthru
      _
    // Predicated region
    $region38: #{tpu_custom_call.1} parent=1 // pred_check
      _
    $region39: #{tpu_custom_call.1} parent=1 // pred_check_branch
      %90 = sbr.rel (0) target = $region41
    $region40: #{tpu_custom_call.1} parent=1 // pred_region
      %92 = dma.done [#allocation3], 896
    $region41: #{tpu_custom_call.1} parent=1 // pred_fallthru
      _
    // Predicated region
    $region42: #{tpu_custom_call.1} parent=1 // pred_check
      _
    $region43: #{tpu_custom_call.1} parent=1 // pred_check_branch
      %94 = sbr.rel (0) target = $region45
    $region44: #{tpu_custom_call.1} parent=1 // pred_region
      %96 = dma.done [#allocation6], 25088
    $region45: #{tpu_custom_call.1} parent=1 // pred_fallthru
      _
    // Predicated region
    $region46: #{tpu_custom_call.1} parent=1 // pred_check
      _
    $region47: #{tpu_custom_call.1} parent=1 // pred_check_branch
      %98 = sbr.rel (0) target = $region49
    $region48: #{tpu_custom_call.1} parent=1 // pred_region
      %100 = dma.done [#allocation6], 4096
    $region49: #{tpu_custom_call.1} parent=1 // pred_fallthru
      _
    // Predicated region
    $region50: #{tpu_custom_call.1} parent=1 // pred_check
      _
    $region51: #{tpu_custom_call.1} parent=1 // pred_check_branch
      %102 = sbr.rel (0) target = $region53
    $region52: #{tpu_custom_call.1} parent=1 // pred_region
      %104 = dma.done [#allocation9], 8192
    $region53: #{tpu_custom_call.1} parent=1 // pred_fallthru
      _
    // Predicated region
    $region54: #{tpu_custom_call.1} parent=1 // pred_check
      _
    $region55: #{tpu_custom_call.1} parent=1 // pred_check_branch
      %106 = sbr.rel (0) target = $region57
    $region56: #{tpu_custom_call.1} parent=1 // pred_region
      %108 = dma.done [#allocation9], 2048
    $region57: #{tpu_custom_call.1} parent=1 // pred_fallthru
      _
    %v110 = vld [vmem:[#allocation2] sm:$0xff]
    %v111 = vld [vmem:[#allocation2 + $0x8] sm:$0xff]
    %v112 = vld [vmem:[#allocation2 + $0x10] sm:$0xff]
    %v113 = vld [vmem:[#allocation2 + $0x18] sm:$0xff]
    %v114 = vld [vmem:[#allocation2 + $0x20] sm:$0xff]
    %v115 = vld [vmem:[#allocation2 + $0x28] sm:$0xff]
    %v116 = vld [vmem:[#allocation2 + $0x30] sm:$0xff]
    %v117 = vpack.c.bf16 %v110, %v110
    %v118 = vpack.c.bf16 %v111, %v111
    %v119 = vpack.c.bf16 %v112, %v112
    %v120 = vpack.c.bf16 %v113, %v113
    %v121 = vpack.c.bf16 %v114, %v114
    %v122 = vpack.c.bf16 %v115, %v115
    %v123 = vpack.c.bf16 %v116, %v116
    %v124 = vld [vmem:[#allocation5] sm:$0xff]
    %v125 = vld [vmem:[#allocation5 + $0x8] sm:$0xff]
    %v126 = vld [vmem:[#allocation5 + $0x10] sm:$0xff]
    %v127 = vld [vmem:[#allocation5 + $0x18] sm:$0xff]
    %v128 = vld [vmem:[#allocation5 + $0x20] sm:$0xff]
    %v129 = vld [vmem:[#allocation5 + $0x28] sm:$0xff]
    %v130 = vld [vmem:[#allocation5 + $0x30] sm:$0xff]
    %v131 = vld [vmem:[#allocation5 + $0x38] sm:$0xff]
    %v132 = vld [vmem:[#allocation5 + $0x40] sm:$0xff]
    %v133 = vld [vmem:[#allocation5 + $0x48] sm:$0xff]
    %v134 = vld [vmem:[#allocation5 + $0x50] sm:$0xff]
    %v135 = vld [vmem:[#allocation5 + $0x58] sm:$0xff]
    %v136 = vld [vmem:[#allocation5 + $0x60] sm:$0xff]
    %v137 = vld [vmem:[#allocation5 + $0x68] sm:$0xff]
    %v138 = vld [vmem:[#allocation5 + $0x70] sm:$0xff]
    %v139 = vld [vmem:[#allocation5 + $0x78] sm:$0xff]
    %v140 = vld [vmem:[#allocation5 + $0x80] sm:$0xff]
    %v141 = vld [vmem:[#allocation5 + $0x88] sm:$0xff]
    %v142 = vld [vmem:[#allocation5 + $0x90] sm:$0xff]
    %v143 = vld [vmem:[#allocation5 + $0x98] sm:$0xff]
    %v144 = vld [vmem:[#allocation5 + $0xa0] sm:$0xff]
    %v145 = vld [vmem:[#allocation5 + $0xa8] sm:$0xff]
    %v146 = vld [vmem:[#allocation5 + $0xb0] sm:$0xff]
    %v147 = vld [vmem:[#allocation5 + $0xb8] sm:$0xff]
    %v148 = vld [vmem:[#allocation5 + $0xc0] sm:$0xff]
    %v149 = vld [vmem:[#allocation5 + $0xc8] sm:$0xff]
    %v150 = vld [vmem:[#allocation5 + $0xd0] sm:$0xff]
    %v151 = vld [vmem:[#allocation5 + $0xd8] sm:$0xff]
    %v152 = vld [vmem:[#allocation5 + $0xe0] sm:$0xff]
    %v153 = vld [vmem:[#allocation5 + $0xe8] sm:$0xff]
    %v154 = vld [vmem:[#allocation5 + $0xf0] sm:$0xff]
    %v155 = vld [vmem:[#allocation5 + $0xf8] sm:$0xff]
    %v156 = vld [vmem:[#allocation5 + $0x100] sm:$0xff]
    %v157 = vld [vmem:[#allocation5 + $0x108] sm:$0xff]
    %v158 = vld [vmem:[#allocation5 + $0x110] sm:$0xff]
    %v159 = vld [vmem:[#allocation5 + $0x118] sm:$0xff]
    %v160 = vld [vmem:[#allocation5 + $0x120] sm:$0xff]
    %v161 = vld [vmem:[#allocation5 + $0x128] sm:$0xff]
    %v162 = vld [vmem:[#allocation5 + $0x130] sm:$0xff]
    %v163 = vld [vmem:[#allocation5 + $0x138] sm:$0xff]
    %v164 = vld [vmem:[#allocation5 + $0x140] sm:$0xff]
    %v165 = vld [vmem:[#allocation5 + $0x148] sm:$0xff]
    %v166 = vld [vmem:[#allocation5 + $0x150] sm:$0xff]
    %v167 = vld [vmem:[#allocation5 + $0x158] sm:$0xff]
    %v168 = vld [vmem:[#allocation5 + $0x160] sm:$0xff]
    %v169 = vld [vmem:[#allocation5 + $0x168] sm:$0xff]
    %v170 = vld [vmem:[#allocation5 + $0x170] sm:$0xff]
    %v171 = vld [vmem:[#allocation5 + $0x178] sm:$0xff]
    %v172 = vld [vmem:[#allocation5 + $0x180] sm:$0xff]
    %v173 = vld [vmem:[#allocation5 + $0x188] sm:$0xff]
    %v174 = vld [vmem:[#allocation5 + $0x190] sm:$0xff]
    %v175 = vld [vmem:[#allocation5 + $0x198] sm:$0xff]
    %v176 = vld [vmem:[#allocation5 + $0x1a0] sm:$0xff]
    %v177 = vld [vmem:[#allocation5 + $0x1a8] sm:$0xff]
    %v178 = vld [vmem:[#allocation5 + $0x1b0] sm:$0xff]
    %v179 = vld [vmem:[#allocation5 + $0x1b8] sm:$0xff]
    %v180 = vld [vmem:[#allocation5 + $0x1c0] sm:$0xff]
    %v181 = vld [vmem:[#allocation5 + $0x1c8] sm:$0xff]
    %v182 = vld [vmem:[#allocation5 + $0x1d0] sm:$0xff]
    %v183 = vld [vmem:[#allocation5 + $0x1d8] sm:$0xff]
    %v184 = vld [vmem:[#allocation5 + $0x1e0] sm:$0xff]
    %v185 = vld [vmem:[#allocation5 + $0x1e8] sm:$0xff]
    %v186 = vld [vmem:[#allocation5 + $0x1f0] sm:$0xff]
    %v187 = vld [vmem:[#allocation5 + $0x1f8] sm:$0xff]
    %v188 = vld [vmem:[#allocation5 + $0x200] sm:$0xff]
    %v189 = vld [vmem:[#allocation5 + $0x208] sm:$0xff]
    %v190 = vld [vmem:[#allocation5 + $0x210] sm:$0xff]
    %v191 = vld [vmem:[#allocation5 + $0x218] sm:$0xff]
    %v192 = vld [vmem:[#allocation5 + $0x220] sm:$0xff]
    %v193 = vld [vmem:[#allocation5 + $0x228] sm:$0xff]
    %v194 = vld [vmem:[#allocation5 + $0x230] sm:$0xff]
    %v195 = vld [vmem:[#allocation5 + $0x238] sm:$0xff]
    %v196 = vld [vmem:[#allocation5 + $0x240] sm:$0xff]
    %v197 = vld [vmem:[#allocation5 + $0x248] sm:$0xff]
    %v198 = vld [vmem:[#allocation5 + $0x250] sm:$0xff]
    %v199 = vld [vmem:[#allocation5 + $0x258] sm:$0xff]
    %v200 = vld [vmem:[#allocation5 + $0x260] sm:$0xff]
    %v201 = vld [vmem:[#allocation5 + $0x268] sm:$0xff]
    %v202 = vld [vmem:[#allocation5 + $0x270] sm:$0xff]
    %v203 = vld [vmem:[#allocation5 + $0x278] sm:$0xff]
    %v204 = vld [vmem:[#allocation5 + $0x280] sm:$0xff]
    %v205 = vld [vmem:[#allocation5 + $0x288] sm:$0xff]
    %v206 = vld [vmem:[#allocation5 + $0x290] sm:$0xff]
    %v207 = vld [vmem:[#allocation5 + $0x298] sm:$0xff]
    %v208 = vld [vmem:[#allocation5 + $0x2a0] sm:$0xff]
    %v209 = vld [vmem:[#allocation5 + $0x2a8] sm:$0xff]
    %v210 = vld [vmem:[#allocation5 + $0x2b0] sm:$0xff]
    %v211 = vld [vmem:[#allocation5 + $0x2b8] sm:$0xff]
    %v212 = vld [vmem:[#allocation5 + $0x2c0] sm:$0xff]
    %v213 = vld [vmem:[#allocation5 + $0x2c8] sm:$0xff]
    %v214 = vld [vmem:[#allocation5 + $0x2d0] sm:$0xff]
    %v215 = vld [vmem:[#allocation5 + $0x2d8] sm:$0xff]
    %v216 = vld [vmem:[#allocation5 + $0x2e0] sm:$0xff]
    %v217 = vld [vmem:[#allocation5 + $0x2e8] sm:$0xff]
    %v218 = vld [vmem:[#allocation5 + $0x2f0] sm:$0xff]
    %v219 = vld [vmem:[#allocation5 + $0x2f8] sm:$0xff]
    %v220 = vld [vmem:[#allocation5 + $0x300] sm:$0xff]
    %v221 = vld [vmem:[#allocation5 + $0x308] sm:$0xff]
    %v222 = vld [vmem:[#allocation5 + $0x310] sm:$0xff]
    %v223 = vld [vmem:[#allocation5 + $0x318] sm:$0xff]
    %v224 = vld [vmem:[#allocation5 + $0x320] sm:$0xff]
    %v225 = vld [vmem:[#allocation5 + $0x328] sm:$0xff]
    %v226 = vld [vmem:[#allocation5 + $0x330] sm:$0xff]
    %v227 = vld [vmem:[#allocation5 + $0x338] sm:$0xff]
    %v228 = vld [vmem:[#allocation5 + $0x340] sm:$0xff]
    %v229 = vld [vmem:[#allocation5 + $0x348] sm:$0xff]
    %v230 = vld [vmem:[#allocation5 + $0x350] sm:$0xff]
    %v231 = vld [vmem:[#allocation5 + $0x358] sm:$0xff]
    %v232 = vld [vmem:[#allocation5 + $0x360] sm:$0xff]
    %v233 = vld [vmem:[#allocation5 + $0x368] sm:$0xff]
    %v234 = vld [vmem:[#allocation5 + $0x370] sm:$0xff]
    %v235 = vld [vmem:[#allocation5 + $0x378] sm:$0xff]
    %v236 = vld [vmem:[#allocation5 + $0x380] sm:$0xff]
    %v237 = vld [vmem:[#allocation5 + $0x388] sm:$0xff]
    %v238 = vld [vmem:[#allocation5 + $0x390] sm:$0xff]
    %v239 = vld [vmem:[#allocation5 + $0x398] sm:$0xff]
    %v240 = vld [vmem:[#allocation5 + $0x3a0] sm:$0xff]
    %v241 = vld [vmem:[#allocation5 + $0x3a8] sm:$0xff]
    %v242 = vld [vmem:[#allocation5 + $0x3b0] sm:$0xff]
    %v243 = vld [vmem:[#allocation5 + $0x3b8] sm:$0xff]
    %v244 = vld [vmem:[#allocation5 + $0x3c0] sm:$0xff]
    %v245 = vld [vmem:[#allocation5 + $0x3c8] sm:$0xff]
    %v246 = vld [vmem:[#allocation5 + $0x3d0] sm:$0xff]
    %v247 = vld [vmem:[#allocation5 + $0x3d8] sm:$0xff]
    %v248 = vld [vmem:[#allocation5 + $0x3e0] sm:$0xff]
    %v249 = vld [vmem:[#allocation5 + $0x3e8] sm:$0xff]
    %v250 = vld [vmem:[#allocation5 + $0x3f0] sm:$0xff]
    %v251 = vld [vmem:[#allocation5 + $0x3f8] sm:$0xff]
    %v252 = vld [vmem:[#allocation5 + $0x400] sm:$0xff]
    %v253 = vld [vmem:[#allocation5 + $0x408] sm:$0xff]
    %v254 = vld [vmem:[#allocation5 + $0x410] sm:$0xff]
    %v255 = vld [vmem:[#allocation5 + $0x418] sm:$0xff]
    %v256 = vld [vmem:[#allocation5 + $0x420] sm:$0xff]
    %v257 = vld [vmem:[#allocation5 + $0x428] sm:$0xff]
    %v258 = vld [vmem:[#allocation5 + $0x430] sm:$0xff]
    %v259 = vld [vmem:[#allocation5 + $0x438] sm:$0xff]
    %v260 = vld [vmem:[#allocation5 + $0x440] sm:$0xff]
    %v261 = vld [vmem:[#allocation5 + $0x448] sm:$0xff]
    %v262 = vld [vmem:[#allocation5 + $0x450] sm:$0xff]
    %v263 = vld [vmem:[#allocation5 + $0x458] sm:$0xff]
    %v264 = vld [vmem:[#allocation5 + $0x460] sm:$0xff]
    %v265 = vld [vmem:[#allocation5 + $0x468] sm:$0xff]
    %v266 = vld [vmem:[#allocation5 + $0x470] sm:$0xff]
    %v267 = vld [vmem:[#allocation5 + $0x478] sm:$0xff]
    %v268 = vld [vmem:[#allocation5 + $0x480] sm:$0xff]
    %v269 = vld [vmem:[#allocation5 + $0x488] sm:$0xff]
    %v270 = vld [vmem:[#allocation5 + $0x490] sm:$0xff]
    %v271 = vld [vmem:[#allocation5 + $0x498] sm:$0xff]
    %v272 = vld [vmem:[#allocation5 + $0x4a0] sm:$0xff]
    %v273 = vld [vmem:[#allocation5 + $0x4a8] sm:$0xff]
    %v274 = vld [vmem:[#allocation5 + $0x4b0] sm:$0xff]
    %v275 = vld [vmem:[#allocation5 + $0x4b8] sm:$0xff]
    %v276 = vld [vmem:[#allocation5 + $0x4c0] sm:$0xff]
    %v277 = vld [vmem:[#allocation5 + $0x4c8] sm:$0xff]
    %v278 = vld [vmem:[#allocation5 + $0x4d0] sm:$0xff]
    %v279 = vld [vmem:[#allocation5 + $0x4d8] sm:$0xff]
    %v280 = vld [vmem:[#allocation5 + $0x4e0] sm:$0xff]
    %v281 = vld [vmem:[#allocation5 + $0x4e8] sm:$0xff]
    %v282 = vld [vmem:[#allocation5 + $0x4f0] sm:$0xff]
    %v283 = vld [vmem:[#allocation5 + $0x4f8] sm:$0xff]
    %v284 = vld [vmem:[#allocation5 + $0x500] sm:$0xff]
    %v285 = vld [vmem:[#allocation5 + $0x508] sm:$0xff]
    %v286 = vld [vmem:[#allocation5 + $0x510] sm:$0xff]
    %v287 = vld [vmem:[#allocation5 + $0x518] sm:$0xff]
    %v288 = vld [vmem:[#allocation5 + $0x520] sm:$0xff]
    %v289 = vld [vmem:[#allocation5 + $0x528] sm:$0xff]
    %v290 = vld [vmem:[#allocation5 + $0x530] sm:$0xff]
    %v291 = vld [vmem:[#allocation5 + $0x538] sm:$0xff]
    %v292 = vld [vmem:[#allocation5 + $0x540] sm:$0xff]
    %v293 = vld [vmem:[#allocation5 + $0x548] sm:$0xff]
    %v294 = vld [vmem:[#allocation5 + $0x550] sm:$0xff]
    %v295 = vld [vmem:[#allocation5 + $0x558] sm:$0xff]
    %v296 = vld [vmem:[#allocation5 + $0x560] sm:$0xff]
    %v297 = vld [vmem:[#allocation5 + $0x568] sm:$0xff]
    %v298 = vld [vmem:[#allocation5 + $0x570] sm:$0xff]
    %v299 = vld [vmem:[#allocation5 + $0x578] sm:$0xff]
    %v300 = vld [vmem:[#allocation5 + $0x580] sm:$0xff]
    %v301 = vld [vmem:[#allocation5 + $0x588] sm:$0xff]
    %v302 = vld [vmem:[#allocation5 + $0x590] sm:$0xff]
    %v303 = vld [vmem:[#allocation5 + $0x598] sm:$0xff]
    %v304 = vld [vmem:[#allocation5 + $0x5a0] sm:$0xff]
    %v305 = vld [vmem:[#allocation5 + $0x5a8] sm:$0xff]
    %v306 = vld [vmem:[#allocation5 + $0x5b0] sm:$0xff]
    %v307 = vld [vmem:[#allocation5 + $0x5b8] sm:$0xff]
    %v308 = vld [vmem:[#allocation5 + $0x5c0] sm:$0xff]
    %v309 = vld [vmem:[#allocation5 + $0x5c8] sm:$0xff]
    %v310 = vld [vmem:[#allocation5 + $0x5d0] sm:$0xff]
    %v311 = vld [vmem:[#allocation5 + $0x5d8] sm:$0xff]
    %v312 = vld [vmem:[#allocation5 + $0x5e0] sm:$0xff]
    %v313 = vld [vmem:[#allocation5 + $0x5e8] sm:$0xff]
    %v314 = vld [vmem:[#allocation5 + $0x5f0] sm:$0xff]
    %v315 = vld [vmem:[#allocation5 + $0x5f8] sm:$0xff]
    %v316 = vld [vmem:[#allocation5 + $0x600] sm:$0xff]
    %v317 = vld [vmem:[#allocation5 + $0x608] sm:$0xff]
    %v318 = vld [vmem:[#allocation5 + $0x610] sm:$0xff]
    %v319 = vld [vmem:[#allocation5 + $0x618] sm:$0xff]
    %v320 = vld [vmem:[%s1] sm:$0xff]
    %v321 = vlaneseq
    %v322 = vand.u32 %v321, 127
    %323 = vset.pattern.permute.xlu0 0
    %324 = vperm.xlu0 %323, %v320
    %v325 = vpop.permute.xlu0 %324
    %vm326 = vcmp.eq.s32.totalorder %v322, %v325
    %v327 = vsel %vm326, 1.0, 0.0
    %v328 = vpack.c.bf16 %v327, %v327
    %v329 = vld [vmem:[#allocation7] sm:$0xff]
    %v330 = vld [vmem:[#allocation7 + $0x8] sm:$0xff]
    %v331 = vld [vmem:[#allocation7 + $0x10] sm:$0xff]
    %v332 = vld [vmem:[#allocation7 + $0x18] sm:$0xff]
    %v333 = vld [vmem:[#allocation7 + $0x20] sm:$0xff]
    %v334 = vld [vmem:[#allocation7 + $0x28] sm:$0xff]
    %v335 = vld [vmem:[#allocation7 + $0x30] sm:$0xff]
    %v336 = vld [vmem:[#allocation7 + $0x38] sm:$0xff]
    %v337 = vld [vmem:[#allocation7 + $0x40] sm:$0xff]
    %v338 = vld [vmem:[#allocation7 + $0x48] sm:$0xff]
    %v339 = vld [vmem:[#allocation7 + $0x50] sm:$0xff]
    %v340 = vld [vmem:[#allocation7 + $0x58] sm:$0xff]
    %v341 = vld [vmem:[#allocation7 + $0x60] sm:$0xff]
    %v342 = vld [vmem:[#allocation7 + $0x68] sm:$0xff]
    %v343 = vld [vmem:[#allocation7 + $0x70] sm:$0xff]
    %v344 = vld [vmem:[#allocation7 + $0x78] sm:$0xff]
    %v345 = vld [vmem:[#allocation7 + $0x80] sm:$0xff]
    %v346 = vld [vmem:[#allocation7 + $0x88] sm:$0xff]
    %v347 = vld [vmem:[#allocation7 + $0x90] sm:$0xff]
    %v348 = vld [vmem:[#allocation7 + $0x98] sm:$0xff]
    %v349 = vld [vmem:[#allocation7 + $0xa0] sm:$0xff]
    %v350 = vld [vmem:[#allocation7 + $0xa8] sm:$0xff]
    %v351 = vld [vmem:[#allocation7 + $0xb0] sm:$0xff]
    %v352 = vld [vmem:[#allocation7 + $0xb8] sm:$0xff]
    %v353 = vld [vmem:[#allocation7 + $0xc0] sm:$0xff]
    %v354 = vld [vmem:[#allocation7 + $0xc8] sm:$0xff]
    %v355 = vld [vmem:[#allocation7 + $0xd0] sm:$0xff]
    %v356 = vld [vmem:[#allocation7 + $0xd8] sm:$0xff]
    %v357 = vld [vmem:[#allocation7 + $0xe0] sm:$0xff]
    %v358 = vld [vmem:[#allocation7 + $0xe8] sm:$0xff]
    %v359 = vld [vmem:[#allocation7 + $0xf0] sm:$0xff]
    %v360 = vld [vmem:[#allocation7 + $0xf8] sm:$0xff]
    %v393 = vunpack.c.l.b16 %v329
    %v394 = vunpack.c.h.b16 %v329
    %v395 = vunpack.c.l.b16 %v330
    %v396 = vunpack.c.h.b16 %v330
    %v397 = vunpack.c.l.b16 %v331
    %v398 = vunpack.c.h.b16 %v331
    %v399 = vunpack.c.l.b16 %v332
    %v400 = vunpack.c.h.b16 %v332
    %v401 = vunpack.c.l.b16 %v333
    %v402 = vunpack.c.h.b16 %v333
    %v403 = vunpack.c.l.b16 %v334
    %v404 = vunpack.c.h.b16 %v334
    %v405 = vunpack.c.l.b16 %v335
    %v406 = vunpack.c.h.b16 %v335
    %v407 = vunpack.c.l.b16 %v336
    %v408 = vunpack.c.h.b16 %v336
    %v409 = vunpack.c.l.b16 %v337
    %v410 = vunpack.c.h.b16 %v337
    %v411 = vunpack.c.l.b16 %v338
    %v412 = vunpack.c.h.b16 %v338
    %v413 = vunpack.c.l.b16 %v339
    %v414 = vunpack.c.h.b16 %v339
    %v415 = vunpack.c.l.b16 %v340
    %v416 = vunpack.c.h.b16 %v340
    %v417 = vunpack.c.l.b16 %v341
    %v418 = vunpack.c.h.b16 %v341
    %v419 = vunpack.c.l.b16 %v342
    %v420 = vunpack.c.h.b16 %v342
    %v421 = vunpack.c.l.b16 %v343
    %v422 = vunpack.c.h.b16 %v343
    %v423 = vunpack.c.l.b16 %v344
    %v424 = vunpack.c.h.b16 %v344
    %v425 = vunpack.c.l.b16 %v345
    %v426 = vunpack.c.h.b16 %v345
    %v427 = vunpack.c.l.b16 %v346
    %v428 = vunpack.c.h.b16 %v346
    %v429 = vunpack.c.l.b16 %v347
    %v430 = vunpack.c.h.b16 %v347
    %v431 = vunpack.c.l.b16 %v348
    %v432 = vunpack.c.h.b16 %v348
    %v433 = vunpack.c.l.b16 %v349
    %v434 = vunpack.c.h.b16 %v349
    %v435 = vunpack.c.l.b16 %v350
    %v436 = vunpack.c.h.b16 %v350
    %v437 = vunpack.c.l.b16 %v351
    %v438 = vunpack.c.h.b16 %v351
    %v439 = vunpack.c.l.b16 %v352
    %v440 = vunpack.c.h.b16 %v352
    %v441 = vunpack.c.l.b16 %v353
    %v442 = vunpack.c.h.b16 %v353
    %v443 = vunpack.c.l.b16 %v354
    %v444 = vunpack.c.h.b16 %v354
    %v445 = vunpack.c.l.b16 %v355
    %v446 = vunpack.c.h.b16 %v355
    %v447 = vunpack.c.l.b16 %v356
    %v448 = vunpack.c.h.b16 %v356
    %v449 = vunpack.c.l.b16 %v357
    %v450 = vunpack.c.h.b16 %v357
    %v451 = vunpack.c.l.b16 %v358
    %v452 = vunpack.c.h.b16 %v358
    %v453 = vunpack.c.l.b16 %v359
    %v454 = vunpack.c.h.b16 %v359
    %v455 = vunpack.c.l.b16 %v360
    %v456 = vunpack.c.h.b16 %v360
    %v457 = vpack.c.b16 %v397, %v393
    %v458 = vpack.c.b16 %v398, %v394
    %v459 = vpack.c.b16 %v399, %v395
    %v460 = vpack.c.b16 %v400, %v396
    %v461 = vpack.c.b16 %v405, %v401
    %v462 = vpack.c.b16 %v406, %v402
    %v463 = vpack.c.b16 %v407, %v403
    %v464 = vpack.c.b16 %v408, %v404
    %v465 = vpack.c.b16 %v413, %v409
    %v466 = vpack.c.b16 %v414, %v410
    %v467 = vpack.c.b16 %v415, %v411
    %v468 = vpack.c.b16 %v416, %v412
    %v469 = vpack.c.b16 %v421, %v417
    %v470 = vpack.c.b16 %v422, %v418
    %v471 = vpack.c.b16 %v423, %v419
    %v472 = vpack.c.b16 %v424, %v420
    %v473 = vpack.c.b16 %v429, %v425
    %v474 = vpack.c.b16 %v430, %v426
    %v475 = vpack.c.b16 %v431, %v427
    %v476 = vpack.c.b16 %v432, %v428
    %v477 = vpack.c.b16 %v437, %v433
    %v478 = vpack.c.b16 %v438, %v434
    %v479 = vpack.c.b16 %v439, %v435
    %v480 = vpack.c.b16 %v440, %v436
    %v481 = vpack.c.b16 %v445, %v441
    %v482 = vpack.c.b16 %v446, %v442
    %v483 = vpack.c.b16 %v447, %v443
    %v484 = vpack.c.b16 %v448, %v444
    %v485 = vpack.c.b16 %v453, %v449
    %v486 = vpack.c.b16 %v454, %v450
    %v487 = vpack.c.b16 %v455, %v451
    %v488 = vpack.c.b16 %v456, %v452
    %521 = vmatpush.bf16.msra.mxu0 %v485
    %522 = vmatpush.bf16.msra.mxu0 %v481
    %523 = vmatpush.bf16.msra.mxu0 %v477
    %524 = vmatpush.bf16.msra.mxu0 %v473
    %525 = vmatpush.bf16.msra.mxu0 %v469
    %526 = vmatpush.bf16.msra.mxu0 %v465
    %527 = vmatpush.bf16.msra.mxu0 %v461
    %528 = vmatpush.bf16.msra.mxu0 %v457
    %529 = vmatmul.bf16.gmra.mxu0 %v328
    %v530 = vpop.f32.mrf.mxu0
    %v531 = vadd.f32 0.0, %v530
    %v532 = vpop.f32.mrf.mxu0
    %533 = vdwg.mxu0
    %534 = vmatpush.bf16.msra.mxu0 %v486
    %535 = vmatpush.bf16.msra.mxu0 %v482
    %536 = vmatpush.bf16.msra.mxu0 %v478
    %537 = vmatpush.bf16.msra.mxu0 %v474
    %538 = vmatpush.bf16.msra.mxu0 %v470
    %539 = vmatpush.bf16.msra.mxu0 %v466
    %540 = vmatpush.bf16.msra.mxu0 %v462
    %541 = vmatpush.bf16.msra.mxu0 %v458
    %542 = vmatmul.bf16.gmra.mxu0 %v328
    %v543 = vpop.f32.mrf.mxu0
    %v544 = vadd.f32 0.0, %v543
    %v545 = vpop.f32.mrf.mxu0
    %546 = vdwg.mxu0
    %547 = vmatpush.bf16.msra.mxu0 %v487
    %548 = vmatpush.bf16.msra.mxu0 %v483
    %549 = vmatpush.bf16.msra.mxu0 %v479
    %550 = vmatpush.bf16.msra.mxu0 %v475
    %551 = vmatpush.bf16.msra.mxu0 %v471
    %552 = vmatpush.bf16.msra.mxu0 %v467
    %553 = vmatpush.bf16.msra.mxu0 %v463
    %554 = vmatpush.bf16.msra.mxu0 %v459
    %555 = vmatmul.bf16.gmra.mxu0 %v328
    %v556 = vpop.f32.mrf.mxu0
    %v557 = vadd.f32 0.0, %v556
    %v558 = vpop.f32.mrf.mxu0
    %559 = vdwg.mxu0
    %560 = vmatpush.bf16.msra.mxu0 %v488
    %561 = vmatpush.bf16.msra.mxu0 %v484
    %562 = vmatpush.bf16.msra.mxu0 %v480
    %563 = vmatpush.bf16.msra.mxu0 %v476
    %564 = vmatpush.bf16.msra.mxu0 %v472
    %565 = vmatpush.bf16.msra.mxu0 %v468
    %566 = vmatpush.bf16.msra.mxu0 %v464
    %567 = vmatpush.bf16.msra.mxu0 %v460
    %568 = vmatmul.bf16.gmra.mxu0 %v328
    %v569 = vpop.f32.mrf.mxu0
    %v570 = vadd.f32 0.0, %v569
    %v571 = vpop.f32.mrf.mxu0
    %572 = vdwg.mxu0
    %v769 = vunpack.c.l.b16 %v124
    %v770 = vunpack.c.h.b16 %v124
    %v771 = vunpack.c.l.b16 %v125
    %v772 = vunpack.c.h.b16 %v125
    %v773 = vunpack.c.l.b16 %v126
    %v774 = vunpack.c.h.b16 %v126
    %v775 = vunpack.c.l.b16 %v127
    %v776 = vunpack.c.h.b16 %v127
    %v777 = vunpack.c.l.b16 %v128
    %v778 = vunpack.c.h.b16 %v128
    %v779 = vunpack.c.l.b16 %v129
    %v780 = vunpack.c.h.b16 %v129
    %v781 = vunpack.c.l.b16 %v130
    %v782 = vunpack.c.h.b16 %v130
    %v783 = vunpack.c.l.b16 %v131
    %v784 = vunpack.c.h.b16 %v131
    %v785 = vunpack.c.l.b16 %v132
    %v786 = vunpack.c.h.b16 %v132
    %v787 = vunpack.c.l.b16 %v133
    %v788 = vunpack.c.h.b16 %v133
    %v789 = vunpack.c.l.b16 %v134
    %v790 = vunpack.c.h.b16 %v134
    %v791 = vunpack.c.l.b16 %v135
    %v792 = vunpack.c.h.b16 %v135
    %v793 = vunpack.c.l.b16 %v136
    %v794 = vunpack.c.h.b16 %v136
    %v795 = vunpack.c.l.b16 %v137
    %v796 = vunpack.c.h.b16 %v137
    %v797 = vunpack.c.l.b16 %v138
    %v798 = vunpack.c.h.b16 %v138
    %v799 = vunpack.c.l.b16 %v139
    %v800 = vunpack.c.h.b16 %v139
    %v801 = vunpack.c.l.b16 %v140
    %v802 = vunpack.c.h.b16 %v140
    %v803 = vunpack.c.l.b16 %v141
    %v804 = vunpack.c.h.b16 %v141
    %v805 = vunpack.c.l.b16 %v142
    %v806 = vunpack.c.h.b16 %v142
    %v807 = vunpack.c.l.b16 %v143
    %v808 = vunpack.c.h.b16 %v143
    %v809 = vunpack.c.l.b16 %v144
    %v810 = vunpack.c.h.b16 %v144
    %v811 = vunpack.c.l.b16 %v145
    %v812 = vunpack.c.h.b16 %v145
    %v813 = vunpack.c.l.b16 %v146
    %v814 = vunpack.c.h.b16 %v146
    %v815 = vunpack.c.l.b16 %v147
    %v816 = vunpack.c.h.b16 %v147
    %v817 = vunpack.c.l.b16 %v148
    %v818 = vunpack.c.h.b16 %v148
    %v819 = vunpack.c.l.b16 %v149
    %v820 = vunpack.c.h.b16 %v149
    %v821 = vunpack.c.l.b16 %v150
    %v822 = vunpack.c.h.b16 %v150
    %v823 = vunpack.c.l.b16 %v151
    %v824 = vunpack.c.h.b16 %v151
    %v825 = vunpack.c.l.b16 %v152
    %v826 = vunpack.c.h.b16 %v152
    %v827 = vunpack.c.l.b16 %v153
    %v828 = vunpack.c.h.b16 %v153
    %v829 = vunpack.c.l.b16 %v154
    %v830 = vunpack.c.h.b16 %v154
    %v831 = vunpack.c.l.b16 %v155
    %v832 = vunpack.c.h.b16 %v155
    %v833 = vunpack.c.l.b16 %v156
    %v834 = vunpack.c.h.b16 %v156
    %v835 = vunpack.c.l.b16 %v157
    %v836 = vunpack.c.h.b16 %v157
    %v837 = vunpack.c.l.b16 %v158
    %v838 = vunpack.c.h.b16 %v158
    %v839 = vunpack.c.l.b16 %v159
    %v840 = vunpack.c.h.b16 %v159
    %v841 = vunpack.c.l.b16 %v160
    %v842 = vunpack.c.h.b16 %v160
    %v843 = vunpack.c.l.b16 %v161
    %v844 = vunpack.c.h.b16 %v161
    %v845 = vunpack.c.l.b16 %v162
    %v846 = vunpack.c.h.b16 %v162
    %v847 = vunpack.c.l.b16 %v163
    %v848 = vunpack.c.h.b16 %v163
    %v849 = vunpack.c.l.b16 %v164
    %v850 = vunpack.c.h.b16 %v164
    %v851 = vunpack.c.l.b16 %v165
    %v852 = vunpack.c.h.b16 %v165
    %v853 = vunpack.c.l.b16 %v166
    %v854 = vunpack.c.h.b16 %v166
    %v855 = vunpack.c.l.b16 %v167
    %v856 = vunpack.c.h.b16 %v167
    %v857 = vunpack.c.l.b16 %v168
    %v858 = vunpack.c.h.b16 %v168
    %v859 = vunpack.c.l.b16 %v169
    %v860 = vunpack.c.h.b16 %v169
    %v861 = vunpack.c.l.b16 %v170
    %v862 = vunpack.c.h.b16 %v170
    %v863 = vunpack.c.l.b16 %v171
    %v864 = vunpack.c.h.b16 %v171
    %v865 = vunpack.c.l.b16 %v172
    %v866 = vunpack.c.h.b16 %v172
    %v867 = vunpack.c.l.b16 %v173
    %v868 = vunpack.c.h.b16 %v173
    %v869 = vunpack.c.l.b16 %v174
    %v870 = vunpack.c.h.b16 %v174
    %v871 = vunpack.c.l.b16 %v175
    %v872 = vunpack.c.h.b16 %v175
    %v873 = vunpack.c.l.b16 %v176
    %v874 = vunpack.c.h.b16 %v176
    %v875 = vunpack.c.l.b16 %v177
    %v876 = vunpack.c.h.b16 %v177
    %v877 = vunpack.c.l.b16 %v178
    %v878 = vunpack.c.h.b16 %v178
    %v879 = vunpack.c.l.b16 %v179
    %v880 = vunpack.c.h.b16 %v179
    %v881 = vunpack.c.l.b16 %v180
    %v882 = vunpack.c.h.b16 %v180
    %v883 = vunpack.c.l.b16 %v181
    %v884 = vunpack.c.h.b16 %v181
    %v885 = vunpack.c.l.b16 %v182
    %v886 = vunpack.c.h.b16 %v182
    %v887 = vunpack.c.l.b16 %v183
    %v888 = vunpack.c.h.b16 %v183
    %v889 = vunpack.c.l.b16 %v184
    %v890 = vunpack.c.h.b16 %v184
    %v891 = vunpack.c.l.b16 %v185
    %v892 = vunpack.c.h.b16 %v185
    %v893 = vunpack.c.l.b16 %v186
    %v894 = vunpack.c.h.b16 %v186
    %v895 = vunpack.c.l.b16 %v187
    %v896 = vunpack.c.h.b16 %v187
    %v897 = vunpack.c.l.b16 %v188
    %v898 = vunpack.c.h.b16 %v188
    %v899 = vunpack.c.l.b16 %v189
    %v900 = vunpack.c.h.b16 %v189
    %v901 = vunpack.c.l.b16 %v190
    %v902 = vunpack.c.h.b16 %v190
    %v903 = vunpack.c.l.b16 %v191
    %v904 = vunpack.c.h.b16 %v191
    %v905 = vunpack.c.l.b16 %v192
    %v906 = vunpack.c.h.b16 %v192
    %v907 = vunpack.c.l.b16 %v193
    %v908 = vunpack.c.h.b16 %v193
    %v909 = vunpack.c.l.b16 %v194
    %v910 = vunpack.c.h.b16 %v194
    %v911 = vunpack.c.l.b16 %v195
    %v912 = vunpack.c.h.b16 %v195
    %v913 = vunpack.c.l.b16 %v196
    %v914 = vunpack.c.h.b16 %v196
    %v915 = vunpack.c.l.b16 %v197
    %v916 = vunpack.c.h.b16 %v197
    %v917 = vunpack.c.l.b16 %v198
    %v918 = vunpack.c.h.b16 %v198
    %v919 = vunpack.c.l.b16 %v199
    %v920 = vunpack.c.h.b16 %v199
    %v921 = vunpack.c.l.b16 %v200
    %v922 = vunpack.c.h.b16 %v200
    %v923 = vunpack.c.l.b16 %v201
    %v924 = vunpack.c.h.b16 %v201
    %v925 = vunpack.c.l.b16 %v202
    %v926 = vunpack.c.h.b16 %v202
    %v927 = vunpack.c.l.b16 %v203
    %v928 = vunpack.c.h.b16 %v203
    %v929 = vunpack.c.l.b16 %v204
    %v930 = vunpack.c.h.b16 %v204
    %v931 = vunpack.c.l.b16 %v205
    %v932 = vunpack.c.h.b16 %v205
    %v933 = vunpack.c.l.b16 %v206
    %v934 = vunpack.c.h.b16 %v206
    %v935 = vunpack.c.l.b16 %v207
    %v936 = vunpack.c.h.b16 %v207
    %v937 = vunpack.c.l.b16 %v208
    %v938 = vunpack.c.h.b16 %v208
    %v939 = vunpack.c.l.b16 %v209
    %v940 = vunpack.c.h.b16 %v209
    %v941 = vunpack.c.l.b16 %v210
    %v942 = vunpack.c.h.b16 %v210
    %v943 = vunpack.c.l.b16 %v211
    %v944 = vunpack.c.h.b16 %v211
    %v945 = vunpack.c.l.b16 %v212
    %v946 = vunpack.c.h.b16 %v212
    %v947 = vunpack.c.l.b16 %v213
    %v948 = vunpack.c.h.b16 %v213
    %v949 = vunpack.c.l.b16 %v214
    %v950 = vunpack.c.h.b16 %v214
    %v951 = vunpack.c.l.b16 %v215
    %v952 = vunpack.c.h.b16 %v215
    %v953 = vunpack.c.l.b16 %v216
    %v954 = vunpack.c.h.b16 %v216
    %v955 = vunpack.c.l.b16 %v217
    %v956 = vunpack.c.h.b16 %v217
    %v957 = vunpack.c.l.b16 %v218
    %v958 = vunpack.c.h.b16 %v218
    %v959 = vunpack.c.l.b16 %v219
    %v960 = vunpack.c.h.b16 %v219
    %v961 = vunpack.c.l.b16 %v220
    %v962 = vunpack.c.h.b16 %v220
    %v963 = vunpack.c.l.b16 %v221
    %v964 = vunpack.c.h.b16 %v221
    %v965 = vunpack.c.l.b16 %v222
    %v966 = vunpack.c.h.b16 %v222
    %v967 = vunpack.c.l.b16 %v223
    %v968 = vunpack.c.h.b16 %v223
    %v969 = vunpack.c.l.b16 %v224
    %v970 = vunpack.c.h.b16 %v224
    %v971 = vunpack.c.l.b16 %v225
    %v972 = vunpack.c.h.b16 %v225
    %v973 = vunpack.c.l.b16 %v226
    %v974 = vunpack.c.h.b16 %v226
    %v975 = vunpack.c.l.b16 %v227
    %v976 = vunpack.c.h.b16 %v227
    %v977 = vunpack.c.l.b16 %v228
    %v978 = vunpack.c.h.b16 %v228
    %v979 = vunpack.c.l.b16 %v229
    %v980 = vunpack.c.h.b16 %v229
    %v981 = vunpack.c.l.b16 %v230
    %v982 = vunpack.c.h.b16 %v230
    %v983 = vunpack.c.l.b16 %v231
    %v984 = vunpack.c.h.b16 %v231
    %v985 = vunpack.c.l.b16 %v232
    %v986 = vunpack.c.h.b16 %v232
    %v987 = vunpack.c.l.b16 %v233
    %v988 = vunpack.c.h.b16 %v233
    %v989 = vunpack.c.l.b16 %v234
    %v990 = vunpack.c.h.b16 %v234
    %v991 = vunpack.c.l.b16 %v235
    %v992 = vunpack.c.h.b16 %v235
    %v993 = vunpack.c.l.b16 %v236
    %v994 = vunpack.c.h.b16 %v236
    %v995 = vunpack.c.l.b16 %v237
    %v996 = vunpack.c.h.b16 %v237
    %v997 = vunpack.c.l.b16 %v238
    %v998 = vunpack.c.h.b16 %v238
    %v999 = vunpack.c.l.b16 %v239
    %v1000 = vunpack.c.h.b16 %v239
    %v1001 = vunpack.c.l.b16 %v240
    %v1002 = vunpack.c.h.b16 %v240
    %v1003 = vunpack.c.l.b16 %v241
    %v1004 = vunpack.c.h.b16 %v241
    %v1005 = vunpack.c.l.b16 %v242
    %v1006 = vunpack.c.h.b16 %v242
    %v1007 = vunpack.c.l.b16 %v243
    %v1008 = vunpack.c.h.b16 %v243
    %v1009 = vunpack.c.l.b16 %v244
    %v1010 = vunpack.c.h.b16 %v244
    %v1011 = vunpack.c.l.b16 %v245
    %v1012 = vunpack.c.h.b16 %v245
    %v1013 = vunpack.c.l.b16 %v246
    %v1014 = vunpack.c.h.b16 %v246
    %v1015 = vunpack.c.l.b16 %v247
    %v1016 = vunpack.c.h.b16 %v247
    %v1017 = vunpack.c.l.b16 %v248
    %v1018 = vunpack.c.h.b16 %v248
    %v1019 = vunpack.c.l.b16 %v249
    %v1020 = vunpack.c.h.b16 %v249
    %v1021 = vunpack.c.l.b16 %v250
    %v1022 = vunpack.c.h.b16 %v250
    %v1023 = vunpack.c.l.b16 %v251
    %v1024 = vunpack.c.h.b16 %v251
    %v1025 = vunpack.c.l.b16 %v252
    %v1026 = vunpack.c.h.b16 %v252
    %v1027 = vunpack.c.l.b16 %v253
    %v1028 = vunpack.c.h.b16 %v253
    %v1029 = vunpack.c.l.b16 %v254
    %v1030 = vunpack.c.h.b16 %v254
    %v1031 = vunpack.c.l.b16 %v255
    %v1032 = vunpack.c.h.b16 %v255
    %v1033 = vunpack.c.l.b16 %v256
    %v1034 = vunpack.c.h.b16 %v256
    %v1035 = vunpack.c.l.b16 %v257
    %v1036 = vunpack.c.h.b16 %v257
    %v1037 = vunpack.c.l.b16 %v258
    %v1038 = vunpack.c.h.b16 %v258
    %v1039 = vunpack.c.l.b16 %v259
    %v1040 = vunpack.c.h.b16 %v259
    %v1041 = vunpack.c.l.b16 %v260
    %v1042 = vunpack.c.h.b16 %v260
    %v1043 = vunpack.c.l.b16 %v261
    %v1044 = vunpack.c.h.b16 %v261
    %v1045 = vunpack.c.l.b16 %v262
    %v1046 = vunpack.c.h.b16 %v262
    %v1047 = vunpack.c.l.b16 %v263
    %v1048 = vunpack.c.h.b16 %v263
    %v1049 = vunpack.c.l.b16 %v264
    %v1050 = vunpack.c.h.b16 %v264
    %v1051 = vunpack.c.l.b16 %v265
    %v1052 = vunpack.c.h.b16 %v265
    %v1053 = vunpack.c.l.b16 %v266
    %v1054 = vunpack.c.h.b16 %v266
    %v1055 = vunpack.c.l.b16 %v267
    %v1056 = vunpack.c.h.b16 %v267
    %v1057 = vunpack.c.l.b16 %v268
    %v1058 = vunpack.c.h.b16 %v268
    %v1059 = vunpack.c.l.b16 %v269
    %v1060 = vunpack.c.h.b16 %v269
    %v1061 = vunpack.c.l.b16 %v270
    %v1062 = vunpack.c.h.b16 %v270
    %v1063 = vunpack.c.l.b16 %v271
    %v1064 = vunpack.c.h.b16 %v271
    %v1065 = vunpack.c.l.b16 %v272
    %v1066 = vunpack.c.h.b16 %v272
    %v1067 = vunpack.c.l.b16 %v273
    %v1068 = vunpack.c.h.b16 %v273
    %v1069 = vunpack.c.l.b16 %v274
    %v1070 = vunpack.c.h.b16 %v274
    %v1071 = vunpack.c.l.b16 %v275
    %v1072 = vunpack.c.h.b16 %v275
    %v1073 = vunpack.c.l.b16 %v276
    %v1074 = vunpack.c.h.b16 %v276
    %v1075 = vunpack.c.l.b16 %v277
    %v1076 = vunpack.c.h.b16 %v277
    %v1077 = vunpack.c.l.b16 %v278
    %v1078 = vunpack.c.h.b16 %v278
    %v1079 = vunpack.c.l.b16 %v279
    %v1080 = vunpack.c.h.b16 %v279
    %v1081 = vunpack.c.l.b16 %v280
    %v1082 = vunpack.c.h.b16 %v280
    %v1083 = vunpack.c.l.b16 %v281
    %v1084 = vunpack.c.h.b16 %v281
    %v1085 = vunpack.c.l.b16 %v282
    %v1086 = vunpack.c.h.b16 %v282
    %v1087 = vunpack.c.l.b16 %v283
    %v1088 = vunpack.c.h.b16 %v283
    %v1089 = vunpack.c.l.b16 %v284
    %v1090 = vunpack.c.h.b16 %v284
    %v1091 = vunpack.c.l.b16 %v285
    %v1092 = vunpack.c.h.b16 %v285
    %v1093 = vunpack.c.l.b16 %v286
    %v1094 = vunpack.c.h.b16 %v286
    %v1095 = vunpack.c.l.b16 %v287
    %v1096 = vunpack.c.h.b16 %v287
    %v1097 = vunpack.c.l.b16 %v288
    %v1098 = vunpack.c.h.b16 %v288
    %v1099 = vunpack.c.l.b16 %v289
    %v1100 = vunpack.c.h.b16 %v289
    %v1101 = vunpack.c.l.b16 %v290
    %v1102 = vunpack.c.h.b16 %v290
    %v1103 = vunpack.c.l.b16 %v291
    %v1104 = vunpack.c.h.b16 %v291
    %v1105 = vunpack.c.l.b16 %v292
    %v1106 = vunpack.c.h.b16 %v292
    %v1107 = vunpack.c.l.b16 %v293
    %v1108 = vunpack.c.h.b16 %v293
    %v1109 = vunpack.c.l.b16 %v294
    %v1110 = vunpack.c.h.b16 %v294
    %v1111 = vunpack.c.l.b16 %v295
    %v1112 = vunpack.c.h.b16 %v295
    %v1113 = vunpack.c.l.b16 %v296
    %v1114 = vunpack.c.h.b16 %v296
    %v1115 = vunpack.c.l.b16 %v297
    %v1116 = vunpack.c.h.b16 %v297
    %v1117 = vunpack.c.l.b16 %v298
    %v1118 = vunpack.c.h.b16 %v298
    %v1119 = vunpack.c.l.b16 %v299
    %v1120 = vunpack.c.h.b16 %v299
    %v1121 = vunpack.c.l.b16 %v300
    %v1122 = vunpack.c.h.b16 %v300
    %v1123 = vunpack.c.l.b16 %v301
    %v1124 = vunpack.c.h.b16 %v301
    %v1125 = vunpack.c.l.b16 %v302
    %v1126 = vunpack.c.h.b16 %v302
    %v1127 = vunpack.c.l.b16 %v303
    %v1128 = vunpack.c.h.b16 %v303
    %v1129 = vunpack.c.l.b16 %v304
    %v1130 = vunpack.c.h.b16 %v304
    %v1131 = vunpack.c.l.b16 %v305
    %v1132 = vunpack.c.h.b16 %v305
    %v1133 = vunpack.c.l.b16 %v306
    %v1134 = vunpack.c.h.b16 %v306
    %v1135 = vunpack.c.l.b16 %v307
    %v1136 = vunpack.c.h.b16 %v307
    %v1137 = vunpack.c.l.b16 %v308
    %v1138 = vunpack.c.h.b16 %v308
    %v1139 = vunpack.c.l.b16 %v309
    %v1140 = vunpack.c.h.b16 %v309
    %v1141 = vunpack.c.l.b16 %v310
    %v1142 = vunpack.c.h.b16 %v310
    %v1143 = vunpack.c.l.b16 %v311
    %v1144 = vunpack.c.h.b16 %v311
    %v1145 = vunpack.c.l.b16 %v312
    %v1146 = vunpack.c.h.b16 %v312
    %v1147 = vunpack.c.l.b16 %v313
    %v1148 = vunpack.c.h.b16 %v313
    %v1149 = vunpack.c.l.b16 %v314
    %v1150 = vunpack.c.h.b16 %v314
    %v1151 = vunpack.c.l.b16 %v315
    %v1152 = vunpack.c.h.b16 %v315
    %v1153 = vunpack.c.l.b16 %v316
    %v1154 = vunpack.c.h.b16 %v316
    %v1155 = vunpack.c.l.b16 %v317
    %v1156 = vunpack.c.h.b16 %v317
    %v1157 = vunpack.c.l.b16 %v318
    %v1158 = vunpack.c.h.b16 %v318
    %v1159 = vunpack.c.l.b16 %v319
    %v1160 = vunpack.c.h.b16 %v319
    %v1161 = vpack.c.b16 %v773, %v769
    %v1162 = vpack.c.b16 %v774, %v770
    %v1163 = vpack.c.b16 %v775, %v771
    %v1164 = vpack.c.b16 %v776, %v772
    %v1165 = vpack.c.b16 %v781, %v777
    %v1166 = vpack.c.b16 %v782, %v778
    %v1167 = vpack.c.b16 %v783, %v779
    %v1168 = vpack.c.b16 %v784, %v780
    %v1169 = vpack.c.b16 %v789, %v785
    %v1170 = vpack.c.b16 %v790, %v786
    %v1171 = vpack.c.b16 %v791, %v787
    %v1172 = vpack.c.b16 %v792, %v788
    %v1173 = vpack.c.b16 %v797, %v793
    %v1174 = vpack.c.b16 %v798, %v794
    %v1175 = vpack.c.b16 %v799, %v795
    %v1176 = vpack.c.b16 %v800, %v796
    %v1177 = vpack.c.b16 %v805, %v801
    %v1178 = vpack.c.b16 %v806, %v802
    %v1179 = vpack.c.b16 %v807, %v803
    %v1180 = vpack.c.b16 %v808, %v804
    %v1181 = vpack.c.b16 %v813, %v809
    %v1182 = vpack.c.b16 %v814, %v810
    %v1183 = vpack.c.b16 %v815, %v811
    %v1184 = vpack.c.b16 %v816, %v812
    %v1185 = vpack.c.b16 %v821, %v817
    %v1186 = vpack.c.b16 %v822, %v818
    %v1187 = vpack.c.b16 %v823, %v819
    %v1188 = vpack.c.b16 %v824, %v820
    %v1189 = vpack.c.b16 %v829, %v825
    %v1190 = vpack.c.b16 %v830, %v826
    %v1191 = vpack.c.b16 %v831, %v827
    %v1192 = vpack.c.b16 %v832, %v828
    %v1193 = vpack.c.b16 %v837, %v833
    %v1194 = vpack.c.b16 %v838, %v834
    %v1195 = vpack.c.b16 %v839, %v835
    %v1196 = vpack.c.b16 %v840, %v836
    %v1197 = vpack.c.b16 %v845, %v841
    %v1198 = vpack.c.b16 %v846, %v842
    %v1199 = vpack.c.b16 %v847, %v843
    %v1200 = vpack.c.b16 %v848, %v844
    %v1201 = vpack.c.b16 %v853, %v849
    %v1202 = vpack.c.b16 %v854, %v850
    %v1203 = vpack.c.b16 %v855, %v851
    %v1204 = vpack.c.b16 %v856, %v852
    %v1205 = vpack.c.b16 %v861, %v857
    %v1206 = vpack.c.b16 %v862, %v858
    %v1207 = vpack.c.b16 %v863, %v859
    %v1208 = vpack.c.b16 %v864, %v860
    %v1209 = vpack.c.b16 %v869, %v865
    %v1210 = vpack.c.b16 %v870, %v866
    %v1211 = vpack.c.b16 %v871, %v867
    %v1212 = vpack.c.b16 %v872, %v868
    %v1213 = vpack.c.b16 %v877, %v873
    %v1214 = vpack.c.b16 %v878, %v874
    %v1215 = vpack.c.b16 %v879, %v875
    %v1216 = vpack.c.b16 %v880, %v876
    %v1217 = vpack.c.b16 %v885, %v881
    %v1218 = vpack.c.b16 %v886, %v882
    %v1219 = vpack.c.b16 %v887, %v883
    %v1220 = vpack.c.b16 %v888, %v884
    %v1221 = vpack.c.b16 %v893, %v889
    %v1222 = vpack.c.b16 %v894, %v890
    %v1223 = vpack.c.b16 %v895, %v891
    %v1224 = vpack.c.b16 %v896, %v892
    %v1225 = vpack.c.b16 %v901, %v897
    %v1226 = vpack.c.b16 %v902, %v898
    %v1227 = vpack.c.b16 %v903, %v899
    %v1228 = vpack.c.b16 %v904, %v900
    %v1229 = vpack.c.b16 %v909, %v905
    %v1230 = vpack.c.b16 %v910, %v906
    %v1231 = vpack.c.b16 %v911, %v907
    %v1232 = vpack.c.b16 %v912, %v908
    %v1233 = vpack.c.b16 %v917, %v913
    %v1234 = vpack.c.b16 %v918, %v914
    %v1235 = vpack.c.b16 %v919, %v915
    %v1236 = vpack.c.b16 %v920, %v916
    %v1237 = vpack.c.b16 %v925, %v921
    %v1238 = vpack.c.b16 %v926, %v922
    %v1239 = vpack.c.b16 %v927, %v923
    %v1240 = vpack.c.b16 %v928, %v924
    %v1241 = vpack.c.b16 %v933, %v929
    %v1242 = vpack.c.b16 %v934, %v930
    %v1243 = vpack.c.b16 %v935, %v931
    %v1244 = vpack.c.b16 %v936, %v932
    %v1245 = vpack.c.b16 %v941, %v937
    %v1246 = vpack.c.b16 %v942, %v938
    %v1247 = vpack.c.b16 %v943, %v939
    %v1248 = vpack.c.b16 %v944, %v940
    %v1249 = vpack.c.b16 %v949, %v945
    %v1250 = vpack.c.b16 %v950, %v946
    %v1251 = vpack.c.b16 %v951, %v947
    %v1252 = vpack.c.b16 %v952, %v948
    %v1253 = vpack.c.b16 %v957, %v953
    %v1254 = vpack.c.b16 %v958, %v954
    %v1255 = vpack.c.b16 %v959, %v955
    %v1256 = vpack.c.b16 %v960, %v956
    %v1257 = vpack.c.b16 %v965, %v961
    %v1258 = vpack.c.b16 %v966, %v962
    %v1259 = vpack.c.b16 %v967, %v963
    %v1260 = vpack.c.b16 %v968, %v964
    %v1261 = vpack.c.b16 %v973, %v969
    %v1262 = vpack.c.b16 %v974, %v970
    %v1263 = vpack.c.b16 %v975, %v971
    %v1264 = vpack.c.b16 %v976, %v972
    %v1265 = vpack.c.b16 %v981, %v977
    %v1266 = vpack.c.b16 %v982, %v978
    %v1267 = vpack.c.b16 %v983, %v979
    %v1268 = vpack.c.b16 %v984, %v980
    %v1269 = vpack.c.b16 %v989, %v985
    %v1270 = vpack.c.b16 %v990, %v986
    %v1271 = vpack.c.b16 %v991, %v987
    %v1272 = vpack.c.b16 %v992, %v988
    %v1273 = vpack.c.b16 %v997, %v993
    %v1274 = vpack.c.b16 %v998, %v994
    %v1275 = vpack.c.b16 %v999, %v995
    %v1276 = vpack.c.b16 %v1000, %v996
    %v1277 = vpack.c.b16 %v1005, %v1001
    %v1278 = vpack.c.b16 %v1006, %v1002
    %v1279 = vpack.c.b16 %v1007, %v1003
    %v1280 = vpack.c.b16 %v1008, %v1004
    %v1281 = vpack.c.b16 %v1013, %v1009
    %v1282 = vpack.c.b16 %v1014, %v1010
    %v1283 = vpack.c.b16 %v1015, %v1011
    %v1284 = vpack.c.b16 %v1016, %v1012
    %v1285 = vpack.c.b16 %v1021, %v1017
    %v1286 = vpack.c.b16 %v1022, %v1018
    %v1287 = vpack.c.b16 %v1023, %v1019
    %v1288 = vpack.c.b16 %v1024, %v1020
    %v1289 = vpack.c.b16 %v1029, %v1025
    %v1290 = vpack.c.b16 %v1030, %v1026
    %v1291 = vpack.c.b16 %v1031, %v1027
    %v1292 = vpack.c.b16 %v1032, %v1028
    %v1293 = vpack.c.b16 %v1037, %v1033
    %v1294 = vpack.c.b16 %v1038, %v1034
    %v1295 = vpack.c.b16 %v1039, %v1035
    %v1296 = vpack.c.b16 %v1040, %v1036
    %v1297 = vpack.c.b16 %v1045, %v1041
    %v1298 = vpack.c.b16 %v1046, %v1042
    %v1299 = vpack.c.b16 %v1047, %v1043
    %v1300 = vpack.c.b16 %v1048, %v1044
    %v1301 = vpack.c.b16 %v1053, %v1049
    %v1302 = vpack.c.b16 %v1054, %v1050
    %v1303 = vpack.c.b16 %v1055, %v1051
    %v1304 = vpack.c.b16 %v1056, %v1052
    %v1305 = vpack.c.b16 %v1061, %v1057
    %v1306 = vpack.c.b16 %v1062, %v1058
    %v1307 = vpack.c.b16 %v1063, %v1059
    %v1308 = vpack.c.b16 %v1064, %v1060
    %v1309 = vpack.c.b16 %v1069, %v1065
    %v1310 = vpack.c.b16 %v1070, %v1066
    %v1311 = vpack.c.b16 %v1071, %v1067
    %v1312 = vpack.c.b16 %v1072, %v1068
    %v1313 = vpack.c.b16 %v1077, %v1073
    %v1314 = vpack.c.b16 %v1078, %v1074
    %v1315 = vpack.c.b16 %v1079, %v1075
    %v1316 = vpack.c.b16 %v1080, %v1076
    %v1317 = vpack.c.b16 %v1085, %v1081
    %v1318 = vpack.c.b16 %v1086, %v1082
    %v1319 = vpack.c.b16 %v1087, %v1083
    %v1320 = vpack.c.b16 %v1088, %v1084
    %v1321 = vpack.c.b16 %v1093, %v1089
    %v1322 = vpack.c.b16 %v1094, %v1090
    %v1323 = vpack.c.b16 %v1095, %v1091
    %v1324 = vpack.c.b16 %v1096, %v1092
    %v1325 = vpack.c.b16 %v1101, %v1097
    %v1326 = vpack.c.b16 %v1102, %v1098
    %v1327 = vpack.c.b16 %v1103, %v1099
    %v1328 = vpack.c.b16 %v1104, %v1100
    %v1329 = vpack.c.b16 %v1109, %v1105
    %v1330 = vpack.c.b16 %v1110, %v1106
    %v1331 = vpack.c.b16 %v1111, %v1107
    %v1332 = vpack.c.b16 %v1112, %v1108
    %v1333 = vpack.c.b16 %v1117, %v1113
    %v1334 = vpack.c.b16 %v1118, %v1114
    %v1335 = vpack.c.b16 %v1119, %v1115
    %v1336 = vpack.c.b16 %v1120, %v1116
    %v1337 = vpack.c.b16 %v1125, %v1121
    %v1338 = vpack.c.b16 %v1126, %v1122
    %v1339 = vpack.c.b16 %v1127, %v1123
    %v1340 = vpack.c.b16 %v1128, %v1124
    %v1341 = vpack.c.b16 %v1133, %v1129
    %v1342 = vpack.c.b16 %v1134, %v1130
    %v1343 = vpack.c.b16 %v1135, %v1131
    %v1344 = vpack.c.b16 %v1136, %v1132
    %v1345 = vpack.c.b16 %v1141, %v1137
    %v1346 = vpack.c.b16 %v1142, %v1138
    %v1347 = vpack.c.b16 %v1143, %v1139
    %v1348 = vpack.c.b16 %v1144, %v1140
    %v1349 = vpack.c.b16 %v1149, %v1145
    %v1350 = vpack.c.b16 %v1150, %v1146
    %v1351 = vpack.c.b16 %v1151, %v1147
    %v1352 = vpack.c.b16 %v1152, %v1148
    %v1353 = vpack.c.b16 %v1157, %v1153
    %v1354 = vpack.c.b16 %v1158, %v1154
    %v1355 = vpack.c.b16 %v1159, %v1155
    %v1356 = vpack.c.b16 %v1160, %v1156
    %vm1553 = vcmask 130048
    %v1555 = vsel %vm1553, %v123, 0
    %1557 = vmatpush.bf16.msra.mxu0 %v1189
    %1558 = vmatpush.bf16.msra.mxu0 %v1185
    %1559 = vmatpush.bf16.msra.mxu0 %v1181
    %1560 = vmatpush.bf16.msra.mxu0 %v1177
    %1561 = vmatpush.bf16.msra.mxu0 %v1173
    %1562 = vmatpush.bf16.msra.mxu0 %v1169
    %1563 = vmatpush.bf16.msra.mxu0 %v1165
    %1564 = vmatpush.bf16.msra.mxu0 %v1161
    %1565 = vmatmul.bf16.gmra.mxu0 %v117
    %v1566 = vpop.f32.mrf.mxu0
    %v1567 = vadd.f32 %v531, %v1566
    %v1568 = vpop.f32.mrf.mxu0
    %1569 = vdwg.mxu0
    %1570 = vmatpush.bf16.msra.mxu0 %v1221
    %1571 = vmatpush.bf16.msra.mxu0 %v1217
    %1572 = vmatpush.bf16.msra.mxu0 %v1213
    %1573 = vmatpush.bf16.msra.mxu0 %v1209
    %1574 = vmatpush.bf16.msra.mxu0 %v1205
    %1575 = vmatpush.bf16.msra.mxu0 %v1201
    %1576 = vmatpush.bf16.msra.mxu0 %v1197
    %1577 = vmatpush.bf16.msra.mxu0 %v1193
    %1578 = vmatmul.bf16.gmra.mxu0 %v118
    %v1579 = vpop.f32.mrf.mxu0
    %v1580 = vadd.f32 %v1567, %v1579
    %v1581 = vpop.f32.mrf.mxu0
    %1582 = vdwg.mxu0
    %1583 = vmatpush.bf16.msra.mxu0 %v1253
    %1584 = vmatpush.bf16.msra.mxu0 %v1249
    %1585 = vmatpush.bf16.msra.mxu0 %v1245
    %1586 = vmatpush.bf16.msra.mxu0 %v1241
    %1587 = vmatpush.bf16.msra.mxu0 %v1237
    %1588 = vmatpush.bf16.msra.mxu0 %v1233
    %1589 = vmatpush.bf16.msra.mxu0 %v1229
    %1590 = vmatpush.bf16.msra.mxu0 %v1225
    %1591 = vmatmul.bf16.gmra.mxu0 %v119
    %v1592 = vpop.f32.mrf.mxu0
    %v1593 = vadd.f32 %v1580, %v1592
    %v1594 = vpop.f32.mrf.mxu0
    %1595 = vdwg.mxu0
    %1596 = vmatpush.bf16.msra.mxu0 %v1285
    %1597 = vmatpush.bf16.msra.mxu0 %v1281
    %1598 = vmatpush.bf16.msra.mxu0 %v1277
    %1599 = vmatpush.bf16.msra.mxu0 %v1273
    %1600 = vmatpush.bf16.msra.mxu0 %v1269
    %1601 = vmatpush.bf16.msra.mxu0 %v1265
    %1602 = vmatpush.bf16.msra.mxu0 %v1261
    %1603 = vmatpush.bf16.msra.mxu0 %v1257
    %1604 = vmatmul.bf16.gmra.mxu0 %v120
    %v1605 = vpop.f32.mrf.mxu0
    %v1606 = vadd.f32 %v1593, %v1605
    %v1607 = vpop.f32.mrf.mxu0
    %1608 = vdwg.mxu0
    %1609 = vmatpush.bf16.msra.mxu0 %v1317
    %1610 = vmatpush.bf16.msra.mxu0 %v1313
    %1611 = vmatpush.bf16.msra.mxu0 %v1309
    %1612 = vmatpush.bf16.msra.mxu0 %v1305
    %1613 = vmatpush.bf16.msra.mxu0 %v1301
    %1614 = vmatpush.bf16.msra.mxu0 %v1297
    %1615 = vmatpush.bf16.msra.mxu0 %v1293
    %1616 = vmatpush.bf16.msra.mxu0 %v1289
    %1617 = vmatmul.bf16.gmra.mxu0 %v121
    %v1618 = vpop.f32.mrf.mxu0
    %v1619 = vadd.f32 %v1606, %v1618
    %v1620 = vpop.f32.mrf.mxu0
    %1621 = vdwg.mxu0
    %1622 = vmatpush.bf16.msra.mxu0 %v1349
    %1623 = vmatpush.bf16.msra.mxu0 %v1345
    %1624 = vmatpush.bf16.msra.mxu0 %v1341
    %1625 = vmatpush.bf16.msra.mxu0 %v1337
    %1626 = vmatpush.bf16.msra.mxu0 %v1333
    %1627 = vmatpush.bf16.msra.mxu0 %v1329
    %1628 = vmatpush.bf16.msra.mxu0 %v1325
    %1629 = vmatpush.bf16.msra.mxu0 %v1321
    %1630 = vmatmul.bf16.gmra.mxu0 %v122
    %v1631 = vpop.f32.mrf.mxu0
    %v1632 = vadd.f32 %v1619, %v1631
    %v1633 = vpop.f32.mrf.mxu0
    %1634 = vdwg.mxu0
    %1635 = vmatpush.bf16.msra.mxu0 0
    %1636 = vmatpush.bf16.msra.mxu0 0
    %1637 = vmatpush.bf16.msra.mxu0 0
    %1638 = vmatpush.bf16.msra.mxu0 0
    %1639 = vmatpush.bf16.msra.mxu0 0
    %1640 = vmatpush.bf16.msra.mxu0 0
    %1641 = vmatpush.bf16.msra.mxu0 0
    %1642 = vmatpush.bf16.msra.mxu0 %v1353
    %1643 = vmatmul.bf16.gmra.mxu0 %v1555
    %v1644 = vpop.f32.mrf.mxu0
    %v1645 = vadd.f32 %v1632, %v1644
    %v1646 = vpop.f32.mrf.mxu0
    %1647 = vdwg.mxu0
    %1648 = vmatpush.bf16.msra.mxu0 %v1190
    %1649 = vmatpush.bf16.msra.mxu0 %v1186
    %1650 = vmatpush.bf16.msra.mxu0 %v1182
    %1651 = vmatpush.bf16.msra.mxu0 %v1178
    %1652 = vmatpush.bf16.msra.mxu0 %v1174
    %1653 = vmatpush.bf16.msra.mxu0 %v1170
    %1654 = vmatpush.bf16.msra.mxu0 %v1166
    %1655 = vmatpush.bf16.msra.mxu0 %v1162
    %1656 = vmatmul.bf16.gmra.mxu0 %v117
    %v1657 = vpop.f32.mrf.mxu0
    %v1658 = vadd.f32 %v544, %v1657
    %v1659 = vpop.f32.mrf.mxu0
    %1660 = vdwg.mxu0
    %1661 = vmatpush.bf16.msra.mxu0 %v1222
    %1662 = vmatpush.bf16.msra.mxu0 %v1218
    %1663 = vmatpush.bf16.msra.mxu0 %v1214
    %1664 = vmatpush.bf16.msra.mxu0 %v1210
    %1665 = vmatpush.bf16.msra.mxu0 %v1206
    %1666 = vmatpush.bf16.msra.mxu0 %v1202
    %1667 = vmatpush.bf16.msra.mxu0 %v1198
    %1668 = vmatpush.bf16.msra.mxu0 %v1194
    %1669 = vmatmul.bf16.gmra.mxu0 %v118
    %v1670 = vpop.f32.mrf.mxu0
    %v1671 = vadd.f32 %v1658, %v1670
    %v1672 = vpop.f32.mrf.mxu0
    %1673 = vdwg.mxu0
    %1674 = vmatpush.bf16.msra.mxu0 %v1254
    %1675 = vmatpush.bf16.msra.mxu0 %v1250
    %1676 = vmatpush.bf16.msra.mxu0 %v1246
    %1677 = vmatpush.bf16.msra.mxu0 %v1242
    %1678 = vmatpush.bf16.msra.mxu0 %v1238
    %1679 = vmatpush.bf16.msra.mxu0 %v1234
    %1680 = vmatpush.bf16.msra.mxu0 %v1230
    %1681 = vmatpush.bf16.msra.mxu0 %v1226
    %1682 = vmatmul.bf16.gmra.mxu0 %v119
    %v1683 = vpop.f32.mrf.mxu0
    %v1684 = vadd.f32 %v1671, %v1683
    %v1685 = vpop.f32.mrf.mxu0
    %1686 = vdwg.mxu0
    %1687 = vmatpush.bf16.msra.mxu0 %v1286
    %1688 = vmatpush.bf16.msra.mxu0 %v1282
    %1689 = vmatpush.bf16.msra.mxu0 %v1278
    %1690 = vmatpush.bf16.msra.mxu0 %v1274
    %1691 = vmatpush.bf16.msra.mxu0 %v1270
    %1692 = vmatpush.bf16.msra.mxu0 %v1266
    %1693 = vmatpush.bf16.msra.mxu0 %v1262
    %1694 = vmatpush.bf16.msra.mxu0 %v1258
    %1695 = vmatmul.bf16.gmra.mxu0 %v120
    %v1696 = vpop.f32.mrf.mxu0
    %v1697 = vadd.f32 %v1684, %v1696
    %v1698 = vpop.f32.mrf.mxu0
    %1699 = vdwg.mxu0
    %1700 = vmatpush.bf16.msra.mxu0 %v1318
    %1701 = vmatpush.bf16.msra.mxu0 %v1314
    %1702 = vmatpush.bf16.msra.mxu0 %v1310
    %1703 = vmatpush.bf16.msra.mxu0 %v1306
    %1704 = vmatpush.bf16.msra.mxu0 %v1302
    %1705 = vmatpush.bf16.msra.mxu0 %v1298
    %1706 = vmatpush.bf16.msra.mxu0 %v1294
    %1707 = vmatpush.bf16.msra.mxu0 %v1290
    %1708 = vmatmul.bf16.gmra.mxu0 %v121
    %v1709 = vpop.f32.mrf.mxu0
    %v1710 = vadd.f32 %v1697, %v1709
    %v1711 = vpop.f32.mrf.mxu0
    %1712 = vdwg.mxu0
    %1713 = vmatpush.bf16.msra.mxu0 %v1350
    %1714 = vmatpush.bf16.msra.mxu0 %v1346
    %1715 = vmatpush.bf16.msra.mxu0 %v1342
    %1716 = vmatpush.bf16.msra.mxu0 %v1338
    %1717 = vmatpush.bf16.msra.mxu0 %v1334
    %1718 = vmatpush.bf16.msra.mxu0 %v1330
    %1719 = vmatpush.bf16.msra.mxu0 %v1326
    %1720 = vmatpush.bf16.msra.mxu0 %v1322
    %1721 = vmatmul.bf16.gmra.mxu0 %v122
    %v1722 = vpop.f32.mrf.mxu0
    %v1723 = vadd.f32 %v1710, %v1722
    %v1724 = vpop.f32.mrf.mxu0
    %1725 = vdwg.mxu0
    %1726 = vmatpush.bf16.msra.mxu0 0
    %1727 = vmatpush.bf16.msra.mxu0 0
    %1728 = vmatpush.bf16.msra.mxu0 0
    %1729 = vmatpush.bf16.msra.mxu0 0
    %1730 = vmatpush.bf16.msra.mxu0 0
    %1731 = vmatpush.bf16.msra.mxu0 0
    %1732 = vmatpush.bf16.msra.mxu0 0
    %1733 = vmatpush.bf16.msra.mxu0 %v1354
    %1734 = vmatmul.bf16.gmra.mxu0 %v1555
    %v1735 = vpop.f32.mrf.mxu0
    %v1736 = vadd.f32 %v1723, %v1735
    %v1737 = vpop.f32.mrf.mxu0
    %1738 = vdwg.mxu0
    %1739 = vmatpush.bf16.msra.mxu0 %v1191
    %1740 = vmatpush.bf16.msra.mxu0 %v1187
    %1741 = vmatpush.bf16.msra.mxu0 %v1183
    %1742 = vmatpush.bf16.msra.mxu0 %v1179
    %1743 = vmatpush.bf16.msra.mxu0 %v1175
    %1744 = vmatpush.bf16.msra.mxu0 %v1171
    %1745 = vmatpush.bf16.msra.mxu0 %v1167
    %1746 = vmatpush.bf16.msra.mxu0 %v1163
    %1747 = vmatmul.bf16.gmra.mxu0 %v117
    %v1748 = vpop.f32.mrf.mxu0
    %v1749 = vadd.f32 %v557, %v1748
    %v1750 = vpop.f32.mrf.mxu0
    %1751 = vdwg.mxu0
    %1752 = vmatpush.bf16.msra.mxu0 %v1223
    %1753 = vmatpush.bf16.msra.mxu0 %v1219
    %1754 = vmatpush.bf16.msra.mxu0 %v1215
    %1755 = vmatpush.bf16.msra.mxu0 %v1211
    %1756 = vmatpush.bf16.msra.mxu0 %v1207
    %1757 = vmatpush.bf16.msra.mxu0 %v1203
    %1758 = vmatpush.bf16.msra.mxu0 %v1199
    %1759 = vmatpush.bf16.msra.mxu0 %v1195
    %1760 = vmatmul.bf16.gmra.mxu0 %v118
    %v1761 = vpop.f32.mrf.mxu0
    %v1762 = vadd.f32 %v1749, %v1761
    %v1763 = vpop.f32.mrf.mxu0
    %1764 = vdwg.mxu0
    %1765 = vmatpush.bf16.msra.mxu0 %v1255
    %1766 = vmatpush.bf16.msra.mxu0 %v1251
    %1767 = vmatpush.bf16.msra.mxu0 %v1247
    %1768 = vmatpush.bf16.msra.mxu0 %v1243
    %1769 = vmatpush.bf16.msra.mxu0 %v1239
    %1770 = vmatpush.bf16.msra.mxu0 %v1235
    %1771 = vmatpush.bf16.msra.mxu0 %v1231
    %1772 = vmatpush.bf16.msra.mxu0 %v1227
    %1773 = vmatmul.bf16.gmra.mxu0 %v119
    %v1774 = vpop.f32.mrf.mxu0
    %v1775 = vadd.f32 %v1762, %v1774
    %v1776 = vpop.f32.mrf.mxu0
    %1777 = vdwg.mxu0
    %1778 = vmatpush.bf16.msra.mxu0 %v1287
    %1779 = vmatpush.bf16.msra.mxu0 %v1283
    %1780 = vmatpush.bf16.msra.mxu0 %v1279
    %1781 = vmatpush.bf16.msra.mxu0 %v1275
    %1782 = vmatpush.bf16.msra.mxu0 %v1271
    %1783 = vmatpush.bf16.msra.mxu0 %v1267
    %1784 = vmatpush.bf16.msra.mxu0 %v1263
    %1785 = vmatpush.bf16.msra.mxu0 %v1259
    %1786 = vmatmul.bf16.gmra.mxu0 %v120
    %v1787 = vpop.f32.mrf.mxu0
    %v1788 = vadd.f32 %v1775, %v1787
    %v1789 = vpop.f32.mrf.mxu0
    %1790 = vdwg.mxu0
    %1791 = vmatpush.bf16.msra.mxu0 %v1319
    %1792 = vmatpush.bf16.msra.mxu0 %v1315
    %1793 = vmatpush.bf16.msra.mxu0 %v1311
    %1794 = vmatpush.bf16.msra.mxu0 %v1307
    %1795 = vmatpush.bf16.msra.mxu0 %v1303
    %1796 = vmatpush.bf16.msra.mxu0 %v1299
    %1797 = vmatpush.bf16.msra.mxu0 %v1295
    %1798 = vmatpush.bf16.msra.mxu0 %v1291
    %1799 = vmatmul.bf16.gmra.mxu0 %v121
    %v1800 = vpop.f32.mrf.mxu0
    %v1801 = vadd.f32 %v1788, %v1800
    %v1802 = vpop.f32.mrf.mxu0
    %1803 = vdwg.mxu0
    %1804 = vmatpush.bf16.msra.mxu0 %v1351
    %1805 = vmatpush.bf16.msra.mxu0 %v1347
    %1806 = vmatpush.bf16.msra.mxu0 %v1343
    %1807 = vmatpush.bf16.msra.mxu0 %v1339
    %1808 = vmatpush.bf16.msra.mxu0 %v1335
    %1809 = vmatpush.bf16.msra.mxu0 %v1331
    %1810 = vmatpush.bf16.msra.mxu0 %v1327
    %1811 = vmatpush.bf16.msra.mxu0 %v1323
    %1812 = vmatmul.bf16.gmra.mxu0 %v122
    %v1813 = vpop.f32.mrf.mxu0
    %v1814 = vadd.f32 %v1801, %v1813
    %v1815 = vpop.f32.mrf.mxu0
    %1816 = vdwg.mxu0
    %1817 = vmatpush.bf16.msra.mxu0 0
    %1818 = vmatpush.bf16.msra.mxu0 0
    %1819 = vmatpush.bf16.msra.mxu0 0
    %1820 = vmatpush.bf16.msra.mxu0 0
    %1821 = vmatpush.bf16.msra.mxu0 0
    %1822 = vmatpush.bf16.msra.mxu0 0
    %1823 = vmatpush.bf16.msra.mxu0 0
    %1824 = vmatpush.bf16.msra.mxu0 %v1355
    %1825 = vmatmul.bf16.gmra.mxu0 %v1555
    %v1826 = vpop.f32.mrf.mxu0
    %v1827 = vadd.f32 %v1814, %v1826
    %v1828 = vpop.f32.mrf.mxu0
    %1829 = vdwg.mxu0
    %1830 = vmatpush.bf16.msra.mxu0 %v1192
    %1831 = vmatpush.bf16.msra.mxu0 %v1188
    %1832 = vmatpush.bf16.msra.mxu0 %v1184
    %1833 = vmatpush.bf16.msra.mxu0 %v1180
    %1834 = vmatpush.bf16.msra.mxu0 %v1176
    %1835 = vmatpush.bf16.msra.mxu0 %v1172
    %1836 = vmatpush.bf16.msra.mxu0 %v1168
    %1837 = vmatpush.bf16.msra.mxu0 %v1164
    %1838 = vmatmul.bf16.gmra.mxu0 %v117
    %v1839 = vpop.f32.mrf.mxu0
    %v1840 = vadd.f32 %v570, %v1839
    %v1841 = vpop.f32.mrf.mxu0
    %1842 = vdwg.mxu0
    %1843 = vmatpush.bf16.msra.mxu0 %v1224
    %1844 = vmatpush.bf16.msra.mxu0 %v1220
    %1845 = vmatpush.bf16.msra.mxu0 %v1216
    %1846 = vmatpush.bf16.msra.mxu0 %v1212
    %1847 = vmatpush.bf16.msra.mxu0 %v1208
    %1848 = vmatpush.bf16.msra.mxu0 %v1204
    %1849 = vmatpush.bf16.msra.mxu0 %v1200
    %1850 = vmatpush.bf16.msra.mxu0 %v1196
    %1851 = vmatmul.bf16.gmra.mxu0 %v118
    %v1852 = vpop.f32.mrf.mxu0
    %v1853 = vadd.f32 %v1840, %v1852
    %v1854 = vpop.f32.mrf.mxu0
    %1855 = vdwg.mxu0
    %1856 = vmatpush.bf16.msra.mxu0 %v1256
    %1857 = vmatpush.bf16.msra.mxu0 %v1252
    %1858 = vmatpush.bf16.msra.mxu0 %v1248
    %1859 = vmatpush.bf16.msra.mxu0 %v1244
    %1860 = vmatpush.bf16.msra.mxu0 %v1240
    %1861 = vmatpush.bf16.msra.mxu0 %v1236
    %1862 = vmatpush.bf16.msra.mxu0 %v1232
    %1863 = vmatpush.bf16.msra.mxu0 %v1228
    %1864 = vmatmul.bf16.gmra.mxu0 %v119
    %v1865 = vpop.f32.mrf.mxu0
    %v1866 = vadd.f32 %v1853, %v1865
    %v1867 = vpop.f32.mrf.mxu0
    %1868 = vdwg.mxu0
    %1869 = vmatpush.bf16.msra.mxu0 %v1288
    %1870 = vmatpush.bf16.msra.mxu0 %v1284
    %1871 = vmatpush.bf16.msra.mxu0 %v1280
    %1872 = vmatpush.bf16.msra.mxu0 %v1276
    %1873 = vmatpush.bf16.msra.mxu0 %v1272
    %1874 = vmatpush.bf16.msra.mxu0 %v1268
    %1875 = vmatpush.bf16.msra.mxu0 %v1264
    %1876 = vmatpush.bf16.msra.mxu0 %v1260
    %1877 = vmatmul.bf16.gmra.mxu0 %v120
    %v1878 = vpop.f32.mrf.mxu0
    %v1879 = vadd.f32 %v1866, %v1878
    %v1880 = vpop.f32.mrf.mxu0
    %1881 = vdwg.mxu0
    %1882 = vmatpush.bf16.msra.mxu0 %v1320
    %1883 = vmatpush.bf16.msra.mxu0 %v1316
    %1884 = vmatpush.bf16.msra.mxu0 %v1312
    %1885 = vmatpush.bf16.msra.mxu0 %v1308
    %1886 = vmatpush.bf16.msra.mxu0 %v1304
    %1887 = vmatpush.bf16.msra.mxu0 %v1300
    %1888 = vmatpush.bf16.msra.mxu0 %v1296
    %1889 = vmatpush.bf16.msra.mxu0 %v1292
    %1890 = vmatmul.bf16.gmra.mxu0 %v121
    %v1891 = vpop.f32.mrf.mxu0
    %v1892 = vadd.f32 %v1879, %v1891
    %v1893 = vpop.f32.mrf.mxu0
    %1894 = vdwg.mxu0
    %1895 = vmatpush.bf16.msra.mxu0 %v1352
    %1896 = vmatpush.bf16.msra.mxu0 %v1348
    %1897 = vmatpush.bf16.msra.mxu0 %v1344
    %1898 = vmatpush.bf16.msra.mxu0 %v1340
    %1899 = vmatpush.bf16.msra.mxu0 %v1336
    %1900 = vmatpush.bf16.msra.mxu0 %v1332
    %1901 = vmatpush.bf16.msra.mxu0 %v1328
    %1902 = vmatpush.bf16.msra.mxu0 %v1324
    %1903 = vmatmul.bf16.gmra.mxu0 %v122
    %v1904 = vpop.f32.mrf.mxu0
    %v1905 = vadd.f32 %v1892, %v1904
    %v1906 = vpop.f32.mrf.mxu0
    %1907 = vdwg.mxu0
    %1908 = vmatpush.bf16.msra.mxu0 0
    %1909 = vmatpush.bf16.msra.mxu0 0
    %1910 = vmatpush.bf16.msra.mxu0 0
    %1911 = vmatpush.bf16.msra.mxu0 0
    %1912 = vmatpush.bf16.msra.mxu0 0
    %1913 = vmatpush.bf16.msra.mxu0 0
    %1914 = vmatpush.bf16.msra.mxu0 0
    %1915 = vmatpush.bf16.msra.mxu0 %v1356
    %1916 = vmatmul.bf16.gmra.mxu0 %v1555
    %v1917 = vpop.f32.mrf.mxu0
    %v1918 = vadd.f32 %v1905, %v1917
    %v1919 = vpop.f32.mrf.mxu0
    %1920 = vdwg.mxu0
    %v1921 = vld [vmem:[%s4] sm:$0xf]
    %v1923 = vperm.slane %v1921, 0
    %v1924 = vperm.slane %v1921, 1
    %v1925 = vperm.slane %v1921, 2
    %v1926 = vperm.slane %v1921, 3
    %v1931 = vadd.f32 %v1645, %v1923
    %v1932 = vadd.f32 %v1736, %v1924
    %v1933 = vadd.f32 %v1827, %v1925
    %v1934 = vadd.f32 %v1918, %v1926
    %vm1935 = vcmp.gt.f32.partialorder %v1931, 0.0
    %vm1936 = vcmp.gt.f32.partialorder %v1932, 0.0
    %vm1937 = vcmp.gt.f32.partialorder %v1933, 0.0
    %vm1938 = vcmp.gt.f32.partialorder %v1934, 0.0
    %v1939 = vmul.f32 %v1931, 0.2
    %v1940 = vmul.f32 %v1932, 0.2
    %v1941 = vmul.f32 %v1933, 0.2
    %v1942 = vmul.f32 %v1934, 0.2
    %v1943 = vsel %vm1935, %v1931, %v1939
    %v1944 = vsel %vm1936, %v1932, %v1940
    %v1945 = vsel %vm1937, %v1933, %v1941
    %v1946 = vsel %vm1938, %v1934, %v1942
    %v1947 = vpack.c.bf16 %v1943, %v1943
    %v1948 = vpack.c.bf16 %v1944, %v1944
    %v1949 = vpack.c.bf16 %v1945, %v1945
    %v1950 = vpack.c.bf16 %v1946, %v1946
    %v1951 = vld [vmem:[#allocation8] sm:$0xff]
    %v1952 = vld [vmem:[#allocation8 + $0x8] sm:$0xff]
    %v1953 = vld [vmem:[#allocation8 + $0x10] sm:$0xff]
    %v1954 = vld [vmem:[#allocation8 + $0x18] sm:$0xff]
    %v1955 = vld [vmem:[#allocation8 + $0x20] sm:$0xff]
    %v1956 = vld [vmem:[#allocation8 + $0x28] sm:$0xff]
    %v1957 = vld [vmem:[#allocation8 + $0x30] sm:$0xff]
    %v1958 = vld [vmem:[#allocation8 + $0x38] sm:$0xff]
    %v1959 = vld [vmem:[#allocation8 + $0x40] sm:$0xff]
    %v1960 = vld [vmem:[#allocation8 + $0x48] sm:$0xff]
    %v1961 = vld [vmem:[#allocation8 + $0x50] sm:$0xff]
    %v1962 = vld [vmem:[#allocation8 + $0x58] sm:$0xff]
    %v1963 = vld [vmem:[#allocation8 + $0x60] sm:$0xff]
    %v1964 = vld [vmem:[#allocation8 + $0x68] sm:$0xff]
    %v1965 = vld [vmem:[#allocation8 + $0x70] sm:$0xff]
    %v1966 = vld [vmem:[#allocation8 + $0x78] sm:$0xff]
    %v1967 = vld [vmem:[#allocation8 + $0x80] sm:$0xff]
    %v1968 = vld [vmem:[#allocation8 + $0x88] sm:$0xff]
    %v1969 = vld [vmem:[#allocation8 + $0x90] sm:$0xff]
    %v1970 = vld [vmem:[#allocation8 + $0x98] sm:$0xff]
    %v1971 = vld [vmem:[#allocation8 + $0xa0] sm:$0xff]
    %v1972 = vld [vmem:[#allocation8 + $0xa8] sm:$0xff]
    %v1973 = vld [vmem:[#allocation8 + $0xb0] sm:$0xff]
    %v1974 = vld [vmem:[#allocation8 + $0xb8] sm:$0xff]
    %v1975 = vld [vmem:[#allocation8 + $0xc0] sm:$0xff]
    %v1976 = vld [vmem:[#allocation8 + $0xc8] sm:$0xff]
    %v1977 = vld [vmem:[#allocation8 + $0xd0] sm:$0xff]
    %v1978 = vld [vmem:[#allocation8 + $0xd8] sm:$0xff]
    %v1979 = vld [vmem:[#allocation8 + $0xe0] sm:$0xff]
    %v1980 = vld [vmem:[#allocation8 + $0xe8] sm:$0xff]
    %v1981 = vld [vmem:[#allocation8 + $0xf0] sm:$0xff]
    %v1982 = vld [vmem:[#allocation8 + $0xf8] sm:$0xff]
    %v1983 = vld [vmem:[#allocation8 + $0x100] sm:$0xff]
    %v1984 = vld [vmem:[#allocation8 + $0x108] sm:$0xff]
    %v1985 = vld [vmem:[#allocation8 + $0x110] sm:$0xff]
    %v1986 = vld [vmem:[#allocation8 + $0x118] sm:$0xff]
    %v1987 = vld [vmem:[#allocation8 + $0x120] sm:$0xff]
    %v1988 = vld [vmem:[#allocation8 + $0x128] sm:$0xff]
    %v1989 = vld [vmem:[#allocation8 + $0x130] sm:$0xff]
    %v1990 = vld [vmem:[#allocation8 + $0x138] sm:$0xff]
    %v1991 = vld [vmem:[#allocation8 + $0x140] sm:$0xff]
    %v1992 = vld [vmem:[#allocation8 + $0x148] sm:$0xff]
    %v1993 = vld [vmem:[#allocation8 + $0x150] sm:$0xff]
    %v1994 = vld [vmem:[#allocation8 + $0x158] sm:$0xff]
    %v1995 = vld [vmem:[#allocation8 + $0x160] sm:$0xff]
    %v1996 = vld [vmem:[#allocation8 + $0x168] sm:$0xff]
    %v1997 = vld [vmem:[#allocation8 + $0x170] sm:$0xff]
    %v1998 = vld [vmem:[#allocation8 + $0x178] sm:$0xff]
    %v1999 = vld [vmem:[#allocation8 + $0x180] sm:$0xff]
    %v2000 = vld [vmem:[#allocation8 + $0x188] sm:$0xff]
    %v2001 = vld [vmem:[#allocation8 + $0x190] sm:$0xff]
    %v2002 = vld [vmem:[#allocation8 + $0x198] sm:$0xff]
    %v2003 = vld [vmem:[#allocation8 + $0x1a0] sm:$0xff]
    %v2004 = vld [vmem:[#allocation8 + $0x1a8] sm:$0xff]
    %v2005 = vld [vmem:[#allocation8 + $0x1b0] sm:$0xff]
    %v2006 = vld [vmem:[#allocation8 + $0x1b8] sm:$0xff]
    %v2007 = vld [vmem:[#allocation8 + $0x1c0] sm:$0xff]
    %v2008 = vld [vmem:[#allocation8 + $0x1c8] sm:$0xff]
    %v2009 = vld [vmem:[#allocation8 + $0x1d0] sm:$0xff]
    %v2010 = vld [vmem:[#allocation8 + $0x1d8] sm:$0xff]
    %v2011 = vld [vmem:[#allocation8 + $0x1e0] sm:$0xff]
    %v2012 = vld [vmem:[#allocation8 + $0x1e8] sm:$0xff]
    %v2013 = vld [vmem:[#allocation8 + $0x1f0] sm:$0xff]
    %v2014 = vld [vmem:[#allocation8 + $0x1f8] sm:$0xff]
    %v2015 = vld [vmem:[%s6] sm:$0x3]
    %v2017 = vperm.slane %v2015, 0
    %v2018 = vperm.slane %v2015, 1
    %v2085 = vunpack.c.l.b16 %v1951
    %v2086 = vunpack.c.h.b16 %v1951
    %v2087 = vunpack.c.l.b16 %v1952
    %v2088 = vunpack.c.h.b16 %v1952
    %v2089 = vunpack.c.l.b16 %v1953
    %v2090 = vunpack.c.h.b16 %v1953
    %v2091 = vunpack.c.l.b16 %v1954
    %v2092 = vunpack.c.h.b16 %v1954
    %v2093 = vunpack.c.l.b16 %v1955
    %v2094 = vunpack.c.h.b16 %v1955
    %v2095 = vunpack.c.l.b16 %v1956
    %v2096 = vunpack.c.h.b16 %v1956
    %v2097 = vunpack.c.l.b16 %v1957
    %v2098 = vunpack.c.h.b16 %v1957
    %v2099 = vunpack.c.l.b16 %v1958
    %v2100 = vunpack.c.h.b16 %v1958
    %v2101 = vunpack.c.l.b16 %v1959
    %v2102 = vunpack.c.h.b16 %v1959
    %v2103 = vunpack.c.l.b16 %v1960
    %v2104 = vunpack.c.h.b16 %v1960
    %v2105 = vunpack.c.l.b16 %v1961
    %v2106 = vunpack.c.h.b16 %v1961
    %v2107 = vunpack.c.l.b16 %v1962
    %v2108 = vunpack.c.h.b16 %v1962
    %v2109 = vunpack.c.l.b16 %v1963
    %v2110 = vunpack.c.h.b16 %v1963
    %v2111 = vunpack.c.l.b16 %v1964
    %v2112 = vunpack.c.h.b16 %v1964
    %v2113 = vunpack.c.l.b16 %v1965
    %v2114 = vunpack.c.h.b16 %v1965
    %v2115 = vunpack.c.l.b16 %v1966
    %v2116 = vunpack.c.h.b16 %v1966
    %v2117 = vunpack.c.l.b16 %v1967
    %v2118 = vunpack.c.h.b16 %v1967
    %v2119 = vunpack.c.l.b16 %v1968
    %v2120 = vunpack.c.h.b16 %v1968
    %v2121 = vunpack.c.l.b16 %v1969
    %v2122 = vunpack.c.h.b16 %v1969
    %v2123 = vunpack.c.l.b16 %v1970
    %v2124 = vunpack.c.h.b16 %v1970
    %v2125 = vunpack.c.l.b16 %v1971
    %v2126 = vunpack.c.h.b16 %v1971
    %v2127 = vunpack.c.l.b16 %v1972
    %v2128 = vunpack.c.h.b16 %v1972
    %v2129 = vunpack.c.l.b16 %v1973
    %v2130 = vunpack.c.h.b16 %v1973
    %v2131 = vunpack.c.l.b16 %v1974
    %v2132 = vunpack.c.h.b16 %v1974
    %v2133 = vunpack.c.l.b16 %v1975
    %v2134 = vunpack.c.h.b16 %v1975
    %v2135 = vunpack.c.l.b16 %v1976
    %v2136 = vunpack.c.h.b16 %v1976
    %v2137 = vunpack.c.l.b16 %v1977
    %v2138 = vunpack.c.h.b16 %v1977
    %v2139 = vunpack.c.l.b16 %v1978
    %v2140 = vunpack.c.h.b16 %v1978
    %v2141 = vunpack.c.l.b16 %v1979
    %v2142 = vunpack.c.h.b16 %v1979
    %v2143 = vunpack.c.l.b16 %v1980
    %v2144 = vunpack.c.h.b16 %v1980
    %v2145 = vunpack.c.l.b16 %v1981
    %v2146 = vunpack.c.h.b16 %v1981
    %v2147 = vunpack.c.l.b16 %v1982
    %v2148 = vunpack.c.h.b16 %v1982
    %v2149 = vunpack.c.l.b16 %v1983
    %v2150 = vunpack.c.h.b16 %v1983
    %v2151 = vunpack.c.l.b16 %v1984
    %v2152 = vunpack.c.h.b16 %v1984
    %v2153 = vunpack.c.l.b16 %v1985
    %v2154 = vunpack.c.h.b16 %v1985
    %v2155 = vunpack.c.l.b16 %v1986
    %v2156 = vunpack.c.h.b16 %v1986
    %v2157 = vunpack.c.l.b16 %v1987
    %v2158 = vunpack.c.h.b16 %v1987
    %v2159 = vunpack.c.l.b16 %v1988
    %v2160 = vunpack.c.h.b16 %v1988
    %v2161 = vunpack.c.l.b16 %v1989
    %v2162 = vunpack.c.h.b16 %v1989
    %v2163 = vunpack.c.l.b16 %v1990
    %v2164 = vunpack.c.h.b16 %v1990
    %v2165 = vunpack.c.l.b16 %v1991
    %v2166 = vunpack.c.h.b16 %v1991
    %v2167 = vunpack.c.l.b16 %v1992
    %v2168 = vunpack.c.h.b16 %v1992
    %v2169 = vunpack.c.l.b16 %v1993
    %v2170 = vunpack.c.h.b16 %v1993
    %v2171 = vunpack.c.l.b16 %v1994
    %v2172 = vunpack.c.h.b16 %v1994
    %v2173 = vunpack.c.l.b16 %v1995
    %v2174 = vunpack.c.h.b16 %v1995
    %v2175 = vunpack.c.l.b16 %v1996
    %v2176 = vunpack.c.h.b16 %v1996
    %v2177 = vunpack.c.l.b16 %v1997
    %v2178 = vunpack.c.h.b16 %v1997
    %v2179 = vunpack.c.l.b16 %v1998
    %v2180 = vunpack.c.h.b16 %v1998
    %v2181 = vunpack.c.l.b16 %v1999
    %v2182 = vunpack.c.h.b16 %v1999
    %v2183 = vunpack.c.l.b16 %v2000
    %v2184 = vunpack.c.h.b16 %v2000
    %v2185 = vunpack.c.l.b16 %v2001
    %v2186 = vunpack.c.h.b16 %v2001
    %v2187 = vunpack.c.l.b16 %v2002
    %v2188 = vunpack.c.h.b16 %v2002
    %v2189 = vunpack.c.l.b16 %v2003
    %v2190 = vunpack.c.h.b16 %v2003
    %v2191 = vunpack.c.l.b16 %v2004
    %v2192 = vunpack.c.h.b16 %v2004
    %v2193 = vunpack.c.l.b16 %v2005
    %v2194 = vunpack.c.h.b16 %v2005
    %v2195 = vunpack.c.l.b16 %v2006
    %v2196 = vunpack.c.h.b16 %v2006
    %v2197 = vunpack.c.l.b16 %v2007
    %v2198 = vunpack.c.h.b16 %v2007
    %v2199 = vunpack.c.l.b16 %v2008
    %v2200 = vunpack.c.h.b16 %v2008
    %v2201 = vunpack.c.l.b16 %v2009
    %v2202 = vunpack.c.h.b16 %v2009
    %v2203 = vunpack.c.l.b16 %v2010
    %v2204 = vunpack.c.h.b16 %v2010
    %v2205 = vunpack.c.l.b16 %v2011
    %v2206 = vunpack.c.h.b16 %v2011
    %v2207 = vunpack.c.l.b16 %v2012
    %v2208 = vunpack.c.h.b16 %v2012
    %v2209 = vunpack.c.l.b16 %v2013
    %v2210 = vunpack.c.h.b16 %v2013
    %v2211 = vunpack.c.l.b16 %v2014
    %v2212 = vunpack.c.h.b16 %v2014
    %v2213 = vpack.c.b16 %v2087, %v2085
    %v2214 = vpack.c.b16 %v2088, %v2086
    %v2215 = vpack.c.b16 %v2091, %v2089
    %v2216 = vpack.c.b16 %v2092, %v2090
    %v2217 = vpack.c.b16 %v2095, %v2093
    %v2218 = vpack.c.b16 %v2096, %v2094
    %v2219 = vpack.c.b16 %v2099, %v2097
    %v2220 = vpack.c.b16 %v2100, %v2098
    %v2221 = vpack.c.b16 %v2103, %v2101
    %v2222 = vpack.c.b16 %v2104, %v2102
    %v2223 = vpack.c.b16 %v2107, %v2105
    %v2224 = vpack.c.b16 %v2108, %v2106
    %v2225 = vpack.c.b16 %v2111, %v2109
    %v2226 = vpack.c.b16 %v2112, %v2110
    %v2227 = vpack.c.b16 %v2115, %v2113
    %v2228 = vpack.c.b16 %v2116, %v2114
    %v2229 = vpack.c.b16 %v2119, %v2117
    %v2230 = vpack.c.b16 %v2120, %v2118
    %v2231 = vpack.c.b16 %v2123, %v2121
    %v2232 = vpack.c.b16 %v2124, %v2122
    %v2233 = vpack.c.b16 %v2127, %v2125
    %v2234 = vpack.c.b16 %v2128, %v2126
    %v2235 = vpack.c.b16 %v2131, %v2129
    %v2236 = vpack.c.b16 %v2132, %v2130
    %v2237 = vpack.c.b16 %v2135, %v2133
    %v2238 = vpack.c.b16 %v2136, %v2134
    %v2239 = vpack.c.b16 %v2139, %v2137
    %v2240 = vpack.c.b16 %v2140, %v2138
    %v2241 = vpack.c.b16 %v2143, %v2141
    %v2242 = vpack.c.b16 %v2144, %v2142
    %v2243 = vpack.c.b16 %v2147, %v2145
    %v2244 = vpack.c.b16 %v2148, %v2146
    %v2245 = vpack.c.b16 %v2151, %v2149
    %v2246 = vpack.c.b16 %v2152, %v2150
    %v2247 = vpack.c.b16 %v2155, %v2153
    %v2248 = vpack.c.b16 %v2156, %v2154
    %v2249 = vpack.c.b16 %v2159, %v2157
    %v2250 = vpack.c.b16 %v2160, %v2158
    %v2251 = vpack.c.b16 %v2163, %v2161
    %v2252 = vpack.c.b16 %v2164, %v2162
    %v2253 = vpack.c.b16 %v2167, %v2165
    %v2254 = vpack.c.b16 %v2168, %v2166
    %v2255 = vpack.c.b16 %v2171, %v2169
    %v2256 = vpack.c.b16 %v2172, %v2170
    %v2257 = vpack.c.b16 %v2175, %v2173
    %v2258 = vpack.c.b16 %v2176, %v2174
    %v2259 = vpack.c.b16 %v2179, %v2177
    %v2260 = vpack.c.b16 %v2180, %v2178
    %v2261 = vpack.c.b16 %v2183, %v2181
    %v2262 = vpack.c.b16 %v2184, %v2182
    %v2263 = vpack.c.b16 %v2187, %v2185
    %v2264 = vpack.c.b16 %v2188, %v2186
    %v2265 = vpack.c.b16 %v2191, %v2189
    %v2266 = vpack.c.b16 %v2192, %v2190
    %v2267 = vpack.c.b16 %v2195, %v2193
    %v2268 = vpack.c.b16 %v2196, %v2194
    %v2269 = vpack.c.b16 %v2199, %v2197
    %v2270 = vpack.c.b16 %v2200, %v2198
    %v2271 = vpack.c.b16 %v2203, %v2201
    %v2272 = vpack.c.b16 %v2204, %v2202
    %v2273 = vpack.c.b16 %v2207, %v2205
    %v2274 = vpack.c.b16 %v2208, %v2206
    %v2275 = vpack.c.b16 %v2211, %v2209
    %v2276 = vpack.c.b16 %v2212, %v2210
    %2341 = vmatpush.bf16.msra.mxu0 %v2227
    %2342 = vmatpush.bf16.msra.mxu0 %v2225
    %2343 = vmatpush.bf16.msra.mxu0 %v2223
    %2344 = vmatpush.bf16.msra.mxu0 %v2221
    %2345 = vmatpush.bf16.msra.mxu0 %v2219
    %2346 = vmatpush.bf16.msra.mxu0 %v2217
    %2347 = vmatpush.bf16.msra.mxu0 %v2215
    %2348 = vmatpush.bf16.msra.mxu0 %v2213
    %2349 = vmatmul.bf16.gmra.mxu0 %v1947
    %v2350 = vpop.f32.mrf.mxu0
    %v2351 = vadd.f32 %v2017, %v2350
    %v2352 = vpop.f32.mrf.mxu0
    %2353 = vdwg.mxu0
    %2354 = vmatpush.bf16.msra.mxu0 %v2243
    %2355 = vmatpush.bf16.msra.mxu0 %v2241
    %2356 = vmatpush.bf16.msra.mxu0 %v2239
    %2357 = vmatpush.bf16.msra.mxu0 %v2237
    %2358 = vmatpush.bf16.msra.mxu0 %v2235
    %2359 = vmatpush.bf16.msra.mxu0 %v2233
    %2360 = vmatpush.bf16.msra.mxu0 %v2231
    %2361 = vmatpush.bf16.msra.mxu0 %v2229
    %2362 = vmatmul.bf16.gmra.mxu0 %v1948
    %v2363 = vpop.f32.mrf.mxu0
    %v2364 = vadd.f32 %v2351, %v2363
    %v2365 = vpop.f32.mrf.mxu0
    %2366 = vdwg.mxu0
    %2367 = vmatpush.bf16.msra.mxu0 %v2259
    %2368 = vmatpush.bf16.msra.mxu0 %v2257
    %2369 = vmatpush.bf16.msra.mxu0 %v2255
    %2370 = vmatpush.bf16.msra.mxu0 %v2253
    %2371 = vmatpush.bf16.msra.mxu0 %v2251
    %2372 = vmatpush.bf16.msra.mxu0 %v2249
    %2373 = vmatpush.bf16.msra.mxu0 %v2247
    %2374 = vmatpush.bf16.msra.mxu0 %v2245
    %2375 = vmatmul.bf16.gmra.mxu0 %v1949
    %v2376 = vpop.f32.mrf.mxu0
    %v2377 = vadd.f32 %v2364, %v2376
    %v2378 = vpop.f32.mrf.mxu0
    %2379 = vdwg.mxu0
    %2380 = vmatpush.bf16.msra.mxu0 %v2275
    %2381 = vmatpush.bf16.msra.mxu0 %v2273
    %2382 = vmatpush.bf16.msra.mxu0 %v2271
    %2383 = vmatpush.bf16.msra.mxu0 %v2269
    %2384 = vmatpush.bf16.msra.mxu0 %v2267
    %2385 = vmatpush.bf16.msra.mxu0 %v2265
    %2386 = vmatpush.bf16.msra.mxu0 %v2263
    %2387 = vmatpush.bf16.msra.mxu0 %v2261
    %2388 = vmatmul.bf16.gmra.mxu0 %v1950
    %v2389 = vpop.f32.mrf.mxu0
    %v2390 = vadd.f32 %v2377, %v2389
    %v2391 = vpop.f32.mrf.mxu0
    %2392 = vdwg.mxu0
    %2393 = vmatpush.bf16.msra.mxu0 %v2228
    %2394 = vmatpush.bf16.msra.mxu0 %v2226
    %2395 = vmatpush.bf16.msra.mxu0 %v2224
    %2396 = vmatpush.bf16.msra.mxu0 %v2222
    %2397 = vmatpush.bf16.msra.mxu0 %v2220
    %2398 = vmatpush.bf16.msra.mxu0 %v2218
    %2399 = vmatpush.bf16.msra.mxu0 %v2216
    %2400 = vmatpush.bf16.msra.mxu0 %v2214
    %2401 = vmatmul.bf16.gmra.mxu0 %v1947
    %v2402 = vpop.f32.mrf.mxu0
    %v2403 = vadd.f32 %v2018, %v2402
    %v2404 = vpop.f32.mrf.mxu0
    %2405 = vdwg.mxu0
    %2406 = vmatpush.bf16.msra.mxu0 %v2244
    %2407 = vmatpush.bf16.msra.mxu0 %v2242
    %2408 = vmatpush.bf16.msra.mxu0 %v2240
    %2409 = vmatpush.bf16.msra.mxu0 %v2238
    %2410 = vmatpush.bf16.msra.mxu0 %v2236
    %2411 = vmatpush.bf16.msra.mxu0 %v2234
    %2412 = vmatpush.bf16.msra.mxu0 %v2232
    %2413 = vmatpush.bf16.msra.mxu0 %v2230
    %2414 = vmatmul.bf16.gmra.mxu0 %v1948
    %v2415 = vpop.f32.mrf.mxu0
    %v2416 = vadd.f32 %v2403, %v2415
    %v2417 = vpop.f32.mrf.mxu0
    %2418 = vdwg.mxu0
    %2419 = vmatpush.bf16.msra.mxu0 %v2260
    %2420 = vmatpush.bf16.msra.mxu0 %v2258
    %2421 = vmatpush.bf16.msra.mxu0 %v2256
    %2422 = vmatpush.bf16.msra.mxu0 %v2254
    %2423 = vmatpush.bf16.msra.mxu0 %v2252
    %2424 = vmatpush.bf16.msra.mxu0 %v2250
    %2425 = vmatpush.bf16.msra.mxu0 %v2248
    %2426 = vmatpush.bf16.msra.mxu0 %v2246
    %2427 = vmatmul.bf16.gmra.mxu0 %v1949
    %v2428 = vpop.f32.mrf.mxu0
    %v2429 = vadd.f32 %v2416, %v2428
    %v2430 = vpop.f32.mrf.mxu0
    %2431 = vdwg.mxu0
    %2432 = vmatpush.bf16.msra.mxu0 %v2276
    %2433 = vmatpush.bf16.msra.mxu0 %v2274
    %2434 = vmatpush.bf16.msra.mxu0 %v2272
    %2435 = vmatpush.bf16.msra.mxu0 %v2270
    %2436 = vmatpush.bf16.msra.mxu0 %v2268
    %2437 = vmatpush.bf16.msra.mxu0 %v2266
    %2438 = vmatpush.bf16.msra.mxu0 %v2264
    %2439 = vmatpush.bf16.msra.mxu0 %v2262
    %2440 = vmatmul.bf16.gmra.mxu0 %v1950
    %v2441 = vpop.f32.mrf.mxu0
    %v2442 = vadd.f32 %v2429, %v2441
    %v2443 = vpop.f32.mrf.mxu0
    %2444 = vdwg.mxu0
    %vm2445 = vcmp.gt.f32.partialorder %v2390, 0.0
    %vm2446 = vcmp.gt.f32.partialorder %v2442, 0.0
    %v2447 = vmul.f32 %v2390, 0.2
    %v2448 = vmul.f32 %v2442, 0.2
    %v2449 = vsel %vm2445, %v2390, %v2447
    %v2450 = vsel %vm2446, %v2442, %v2448
    %v2451 = vpack.c.bf16 %v2449, %v2449
    %v2452 = vpack.c.bf16 %v2450, %v2450
    %v2453 = vld [vmem:[#allocation10] sm:$0xf]
    %v2454 = vld [vmem:[#allocation10 + $0x4] sm:$0xf]
    %v2455 = vld [vmem:[#allocation10 + $0x8] sm:$0xf]
    %v2456 = vld [vmem:[#allocation10 + $0xc] sm:$0xf]
    %v2457 = vld [vmem:[#allocation10 + $0x10] sm:$0xf]
    %v2458 = vld [vmem:[#allocation10 + $0x14] sm:$0xf]
    %v2459 = vld [vmem:[#allocation10 + $0x18] sm:$0xf]
    %v2460 = vld [vmem:[#allocation10 + $0x1c] sm:$0xf]
    %v2461 = vld [vmem:[#allocation10 + $0x20] sm:$0xf]
    %v2462 = vld [vmem:[#allocation10 + $0x24] sm:$0xf]
    %v2463 = vld [vmem:[#allocation10 + $0x28] sm:$0xf]
    %v2464 = vld [vmem:[#allocation10 + $0x2c] sm:$0xf]
    %v2465 = vld [vmem:[#allocation10 + $0x30] sm:$0xf]
    %v2466 = vld [vmem:[#allocation10 + $0x34] sm:$0xf]
    %v2467 = vld [vmem:[#allocation10 + $0x38] sm:$0xf]
    %v2468 = vld [vmem:[#allocation10 + $0x3c] sm:$0xf]
    %v2469 = vld [vmem:[#allocation10 + $0x40] sm:$0xf]
    %v2470 = vld [vmem:[#allocation10 + $0x44] sm:$0xf]
    %v2471 = vld [vmem:[#allocation10 + $0x48] sm:$0xf]
    %v2472 = vld [vmem:[#allocation10 + $0x4c] sm:$0xf]
    %v2473 = vld [vmem:[#allocation10 + $0x50] sm:$0xf]
    %v2474 = vld [vmem:[#allocation10 + $0x54] sm:$0xf]
    %v2475 = vld [vmem:[#allocation10 + $0x58] sm:$0xf]
    %v2476 = vld [vmem:[#allocation10 + $0x5c] sm:$0xf]
    %v2477 = vld [vmem:[#allocation10 + $0x60] sm:$0xf]
    %v2478 = vld [vmem:[#allocation10 + $0x64] sm:$0xf]
    %v2479 = vld [vmem:[#allocation10 + $0x68] sm:$0xf]
    %v2480 = vld [vmem:[#allocation10 + $0x6c] sm:$0xf]
    %v2481 = vld [vmem:[#allocation10 + $0x70] sm:$0xf]
    %v2482 = vld [vmem:[#allocation10 + $0x74] sm:$0xf]
    %v2483 = vld [vmem:[#allocation10 + $0x78] sm:$0xf]
    %v2484 = vld [vmem:[#allocation10 + $0x7c] sm:$0xf]
    %v2485 = vld [vmem:[%s8] sm:$0x1]
    %v2487 = vperm.slane %v2485, 0
    %v2521 = vunpack.c.l.b16 %v2453
    %v2522 = vunpack.c.l.b16 %v2454
    %v2523 = vunpack.c.l.b16 %v2455
    %v2524 = vunpack.c.l.b16 %v2456
    %v2525 = vunpack.c.l.b16 %v2457
    %v2526 = vunpack.c.l.b16 %v2458
    %v2527 = vunpack.c.l.b16 %v2459
    %v2528 = vunpack.c.l.b16 %v2460
    %v2529 = vunpack.c.l.b16 %v2461
    %v2530 = vunpack.c.l.b16 %v2462
    %v2531 = vunpack.c.l.b16 %v2463
    %v2532 = vunpack.c.l.b16 %v2464
    %v2533 = vunpack.c.l.b16 %v2465
    %v2534 = vunpack.c.l.b16 %v2466
    %v2535 = vunpack.c.l.b16 %v2467
    %v2536 = vunpack.c.l.b16 %v2468
    %v2537 = vunpack.c.l.b16 %v2469
    %v2538 = vunpack.c.l.b16 %v2470
    %v2539 = vunpack.c.l.b16 %v2471
    %v2540 = vunpack.c.l.b16 %v2472
    %v2541 = vunpack.c.l.b16 %v2473
    %v2542 = vunpack.c.l.b16 %v2474
    %v2543 = vunpack.c.l.b16 %v2475
    %v2544 = vunpack.c.l.b16 %v2476
    %v2545 = vunpack.c.l.b16 %v2477
    %v2546 = vunpack.c.l.b16 %v2478
    %v2547 = vunpack.c.l.b16 %v2479
    %v2548 = vunpack.c.l.b16 %v2480
    %v2549 = vunpack.c.l.b16 %v2481
    %v2550 = vunpack.c.l.b16 %v2482
    %v2551 = vunpack.c.l.b16 %v2483
    %v2552 = vunpack.c.l.b16 %v2484
    %v2553 = vpack.c.b16 %v2522, %v2521
    %v2554 = vpack.c.b16 %v2524, %v2523
    %v2555 = vpack.c.b16 %v2526, %v2525
    %v2556 = vpack.c.b16 %v2528, %v2527
    %v2557 = vpack.c.b16 %v2530, %v2529
    %v2558 = vpack.c.b16 %v2532, %v2531
    %v2559 = vpack.c.b16 %v2534, %v2533
    %v2560 = vpack.c.b16 %v2536, %v2535
    %v2561 = vpack.c.b16 %v2538, %v2537
    %v2562 = vpack.c.b16 %v2540, %v2539
    %v2563 = vpack.c.b16 %v2542, %v2541
    %v2564 = vpack.c.b16 %v2544, %v2543
    %v2565 = vpack.c.b16 %v2546, %v2545
    %v2566 = vpack.c.b16 %v2548, %v2547
    %v2567 = vpack.c.b16 %v2550, %v2549
    %v2568 = vpack.c.b16 %v2552, %v2551
    %2585 = vmatpush.bf16.msra.mxu0 %v2560
    %2586 = vmatpush.bf16.msra.mxu0 %v2559
    %2587 = vmatpush.bf16.msra.mxu0 %v2558
    %2588 = vmatpush.bf16.msra.mxu0 %v2557
    %2589 = vmatpush.bf16.msra.mxu0 %v2556
    %2590 = vmatpush.bf16.msra.mxu0 %v2555
    %2591 = vmatpush.bf16.msra.mxu0 %v2554
    %2592 = vmatpush.bf16.msra.mxu0 %v2553
    %2593 = vmatmul.bf16.gmra.mxu0 %v2451
    %v2594 = vpop.f32.mrf.mxu0
    %v2595 = vadd.f32 %v2487, %v2594
    %v2596 = vpop.f32.mrf.mxu0
    %2597 = vdwg.mxu0
    %2598 = vmatpush.bf16.msra.mxu0 %v2568
    %2599 = vmatpush.bf16.msra.mxu0 %v2567
    %2600 = vmatpush.bf16.msra.mxu0 %v2566
    %2601 = vmatpush.bf16.msra.mxu0 %v2565
    %2602 = vmatpush.bf16.msra.mxu0 %v2564
    %2603 = vmatpush.bf16.msra.mxu0 %v2563
    %2604 = vmatpush.bf16.msra.mxu0 %v2562
    %2605 = vmatpush.bf16.msra.mxu0 %v2561
    %2606 = vmatmul.bf16.gmra.mxu0 %v2452
    %v2607 = vpop.f32.mrf.mxu0
    %v2608 = vadd.f32 %v2595, %v2607
    %v2609 = vpop.f32.mrf.mxu0
    %2610 = vdwg.mxu0
    %v2611 = vxor.u32 %v2608, 2147483648
    %v2612 = vmul.f32 %v2611, 1.442695
    %v2613 = vpow.pop %v2612
    %v2614 = vadd.f32 %v2613, 1.0
    %v2615 = vrcp.pop %v2614
    %v2616 = vmul.f32 %v2614, %v2615
    %v2617 = vsub.f32 1.0, %v2616
    %v2618 = vmul.f32 %v2615, %v2617
    %v2619 = vadd.f32 %v2615, %v2618
    %vm2620 = vweird.f32 %v2614
    %vm2621 = vweird.f32 %v2615
    %vm2622 = vmor %vm2620, %vm2621
    %v2623 = vsel %vm2622, %v2615, %v2619
    %v2624 = vand.u32 2147483647, %v2614
    %vm2625 = vcmp.eq.f32.partialorder %v2624, 8.507059e+37
    %v2626 = vand.u32 %v2614, 2147483648
    %v2627 = vor.u32 1.1754944e-38, %v2626
    %v2628 = vsel %vm2625, %v2627, %v2623
    %v2629 = vmul.f32 1.0, %v2628
    %v2630 = vpack.c.bf16 %v2629, %v2629
    %2631 = vst [vmem:[#allocation11] sm:$0xf] %v2630
    // Predicated region
    $region58: #{tpu_custom_call.1} parent=1 // pred_check
      _
    $region59: #{tpu_custom_call.1} parent=1 // pred_check_branch
      %2633 = sbr.rel (0) target = $region61
    $region60: #{tpu_custom_call.1} parent=1 // pred_region
      %2635 = vsyncadd [#allocation4], 0
      %s2637 = sshll.u32 [#allocation11], 4
      %s2638 = int_to_ptr.vmem [resolvable:$true] %s2637
      %s2639 = sshll.u32 %s9, 4
      %s2640 = int_to_ptr.hbm [resolvable:$true] %s2639
      %2642 = dma.vmem_to_hbm [thread:$0]  %s2638, 64, %s2640, [#allocation4]
    $region61: #{tpu_custom_call.1} parent=1 // pred_fallthru
      _
    // Predicated region
    $region62: #{tpu_custom_call.1} parent=1 // pred_check
      _
    $region63: #{tpu_custom_call.1} parent=1 // pred_check_branch
      %2644 = sbr.rel (0) target = $region65
    $region64: #{tpu_custom_call.1} parent=1 // pred_region
      %2646 = dma.done [#allocation4], 64
    $region65: #{tpu_custom_call.1} parent=1 // pred_fallthru
      _
    %2647 = vsyncpa [#allocation3], 1
    %2648 = vsyncpa [#allocation6], 1
    %2649 = vsyncpa [#allocation9], 1
    %2650 = vsyncpa [#allocation4], 1

</llo_original>
